<compile_context>
chip_gen: v7x
topology: tpu7x:2x2x1
jax: 0.10.0
libtpu: 0.0.40
codegen_flags: <defaults>
</compile_context>

<pallas_src>
import jax
import jax.numpy as jnp
from jax import lax
from jax.experimental import pallas as pl
from jax.experimental.pallas import tpu as pltpu

HIDDEN = 64


def _critic_kernel(obs_ref, act_ref, w1o_ref, w1a_ref, b1_ref,
                   wih_ref, whh_ref, blstm_ref, w2_ref, b2_ref, out_ref):
    """Whole forward pass for one (small) batch, entirely resident in VMEM/vregs.

    obs_ref:   (B, T, Do)  f32, act_ref: (B, T, Da) f32   (batch-major, as PyTorch)
    w1o_ref:   (Do, H) bf16, w1a_ref: (Da, H) bf16, b1_ref: (1, H) f32
    wih_ref:   (H, 4H) bf16, whh_ref: (H, 4H) bf16, blstm_ref: (1, 4H) f32 (b_ih + b_hh)
    w2_ref:    (H, out) bf16, b2_ref: (1, out) f32
    out_ref:   (B, out) f32
    Gate column order is the PyTorch default [i | f | g | o].
    """
    B, T, Do = obs_ref.shape
    Da = act_ref.shape[2]
    H = whh_ref.shape[0]
    bf16 = jnp.bfloat16
    f32 = jnp.float32

    # ---- dense1 (TimeDistributed) + ReLU + LSTM input projection: two big MXU matmuls ----
    obs2 = obs_ref[...].reshape(B * T, Do).astype(bf16)
    act2 = act_ref[...].reshape(B * T, Da).astype(bf16)
    h1 = (jnp.dot(obs2, w1o_ref[...], preferred_element_type=f32)
          + jnp.dot(act2, w1a_ref[...], preferred_element_type=f32)
          + b1_ref[...])
    h1 = jnp.maximum(h1, 0.0)                                            # (B*T, H)

    # x_gates[b*T + t, :] = relu(dense1(x_{b,t})) @ Wih + (bias_ih + bias_hh)
    x_gates = (jnp.dot(h1.astype(bf16), wih_ref[...], preferred_element_type=f32)
               + blstm_ref[...])                                         # (B*T, 4H) f32

    whh = whh_ref[...]                                                   # (H, 4H) bf16

    # Lane mask for the [g | o] half: lanes < H hold the tanh gate g.
    g_mask = lax.broadcasted_iota(jnp.int32, (B, 2 * H), 1) < H

    def gather_step(t):
        # Rows of x_gates are batch-major (row = b*T + t). t is a Python int (loop is
        # unrolled), so these are static sublane slices + one small concat.
        rows = [x_gates[b * T + t:b * T + t + 1, :] for b in range(B)]
        return jnp.concatenate(rows, axis=0)                             # (B, 4H)

    h = jnp.zeros((B, H), f32)
    c = jnp.zeros((B, H), f32)
    for t in range(T):                         # static T -> fully unrolled recurrence
        gates = gather_step(t) + jnp.dot(h.astype(bf16), whh,
                                         preferred_element_type=f32)     # (B, 4H)
        sif = jax.nn.sigmoid(gates[:, :2 * H])           # [i | f]: full 128-lane vreg sigmoid
        go = gates[:, 2 * H:]                            # [g | o]: tanh / sigmoid mix
        th = jnp.tanh(jnp.where(g_mask, go, 0.5 * go))   # sigmoid(x) = 0.5*(tanh(x/2) + 1)
        act = jnp.where(g_mask, th, 0.5 * th + 0.5)      # [tanh(g) | sigmoid(o)]
        i_g = sif[:, :H]
        f_g = sif[:, H:]
        g_g = act[:, :H]
        o_g = act[:, H:]
        c = f_g * c + i_g * g_g
        h = o_g * jnp.tanh(c)

    # ReLU on the last LSTM hidden state, then dense2.
    hr = jnp.maximum(h, 0.0)
    out_ref[...] = (jnp.dot(hr.astype(bf16), w2_ref[...], preferred_element_type=f32)
                    + b2_ref[...])


@jax.jit
def critic_forward(obs, action, params):
    """obs: (B, T, obs_dim), action: (B, T, act_dim) -> (B, out_dim)."""
    w1o, w1a, b1, wih, whh, blstm, w2, b2 = params
    B = obs.shape[0]
    out_dim = w2.shape[1]

    vmem = pl.BlockSpec(memory_space=pltpu.MemorySpace.VMEM)
    return pl.pallas_call(
        _critic_kernel,
        out_shape=jax.ShapeDtypeStruct((B, out_dim), jnp.float32),
        in_specs=[vmem] * 10,
        out_specs=vmem,
    )(obs, action, w1o, w1a, b1, wih, whh, blstm, w2, b2)


def init_params(key, obs_dim, act_dim, out_dim, hidden=HIDDEN):
    """PyTorch-default-style init. Weights stored transposed ((in, out)) and in bf16 for the
    MXU; biases stay f32. dense1's weight is split into obs / action row blocks."""
    ks = jax.random.split(key, 9)
    input_dim = obs_dim + act_dim
    bf16 = jnp.bfloat16

    def unif(k, shape, fan_in):
        bound = 1.0 / jnp.sqrt(float(fan_in))
        return jax.random.uniform(k, shape, jnp.float32, -bound, bound)

    # dense1: Linear(input_dim, hidden) -> transposed (in, out), split by input rows.
    w1o = unif(ks[0], (obs_dim, hidden), input_dim).astype(bf16)
    w1a = unif(ks[1], (act_dim, hidden), input_dim).astype(bf16)
    b1 = unif(ks[2], (1, hidden), input_dim)
    # LSTM(hidden, hidden): weight_ih/hh (4H, H) -> transposed (H, 4H); gate order i,f,g,o.
    wih = unif(ks[3], (hidden, 4 * hidden), hidden).astype(bf16)
    whh = unif(ks[4], (hidden, 4 * hidden), hidden).astype(bf16)
    blstm = unif(ks[5], (1, 4 * hidden), hidden) + unif(ks[6], (1, 4 * hidden), hidden)
    # dense2: Linear(hidden, out_dim)
    w2 = unif(ks[7], (hidden, out_dim), hidden).astype(bf16)
    b2 = unif(ks[8], (1, out_dim), hidden)
    return (w1o, w1a, b1, wih, whh, blstm, w2, b2)


def critic_forward_ref(obs, action, params):
    """Pure-JAX f32 reference mirroring the PyTorch forward (same bf16-stored weights)."""
    w1o, w1a, b1, wih, whh, blstm, w2, b2 = [p.astype(jnp.float32) for p in params]
    H = HIDDEN
    obs = obs.astype(jnp.float32)
    action = action.astype(jnp.float32)
    h1 = jnp.maximum(jnp.einsum('bto,oh->bth', obs, w1o)
                     + jnp.einsum('bta,ah->bth', action, w1a) + b1[0], 0.0)  # (B, T, H)
    B, T, _ = h1.shape

    def step(carry, xt):
        h, c = carry
        gates = xt @ wih + h @ whh + blstm[0]
        i = jax.nn.sigmoid(gates[:, 0 * H:1 * H])
        f = jax.nn.sigmoid(gates[:, 1 * H:2 * H])
        g = jnp.tanh(gates[:, 2 * H:3 * H])
        o = jax.nn.sigmoid(gates[:, 3 * H:4 * H])
        c = f * c + i * g
        h = o * jnp.tanh(c)
        return (h, c), None

    (h_last, _), _ = lax.scan(
        step,
        (jnp.zeros((B, H), jnp.float32), jnp.zeros((B, H), jnp.float32)),
        jnp.transpose(h1, (1, 0, 2)))
    return jnp.maximum(h_last, 0.0) @ w2 + b2[0]


if __name__ == "__main__":
    B, T = 2, 8
    obs_dim, act_dim, out_dim = 12, 4, 4

    key = jax.random.PRNGKey(0)
    k_obs, k_act, k_par = jax.random.split(key, 3)
    obs = jax.random.normal(k_obs, (B, T, obs_dim), jnp.float32)
    action = jax.random.normal(k_act, (B, T, act_dim), jnp.float32)
    params = init_params(k_par, obs_dim, act_dim, out_dim)

    out = critic_forward(obs, action, params)
    out = jax.block_until_ready(out)

    ref = critic_forward_ref(obs, action, params)
    assert out.shape == (B, out_dim)
    # bf16 matmul operands (f32 accumulation) vs. all-f32 reference -> relaxed tolerance.
    assert jnp.allclose(out, ref, atol=2e-2, rtol=2e-2), (out, ref)

    print("KERNEL_OK")
</pallas_src>

<mosaic_0001>
module attributes {stable_mosaic.version = 11 : i64} {
  func.func @_critic_kernel(%arg0: memref<2x8x12xf32, #tpu.memory_space<vmem>>, %arg1: memref<2x8x4xf32, #tpu.memory_space<vmem>>, %arg2: memref<12x64xbf16, #tpu.memory_space<vmem>>, %arg3: memref<4x64xbf16, #tpu.memory_space<vmem>>, %arg4: memref<1x64xf32, #tpu.memory_space<vmem>>, %arg5: memref<64x256xbf16, #tpu.memory_space<vmem>>, %arg6: memref<64x256xbf16, #tpu.memory_space<vmem>>, %arg7: memref<1x256xf32, #tpu.memory_space<vmem>>, %arg8: memref<64x4xbf16, #tpu.memory_space<vmem>>, %arg9: memref<1x4xf32, #tpu.memory_space<vmem>>, %arg10: memref<2x4xf32, #tpu.memory_space<vmem>>) attributes {dimension_semantics = [], scalar_prefetch = 0 : i64, scratch_operands = 0 : i64, tpu.core_type = #tpu.core_type<tc>} {
    %c0 = arith.constant 0 : index
    %c0_0 = arith.constant 0 : index
    %c0_1 = arith.constant 0 : index
    %0 = vector.load %arg0[%c0, %c0_0, %c0_1] : memref<2x8x12xf32, #tpu.memory_space<vmem>>, vector<2x8x12xf32>
    %1 = vector.shape_cast %0 : vector<2x8x12xf32> to vector<16x12xf32>
    %2 = arith.truncf %1 : vector<16x12xf32> to vector<16x12xbf16>
    %c0_2 = arith.constant 0 : index
    %c0_3 = arith.constant 0 : index
    %c0_4 = arith.constant 0 : index
    %3 = vector.load %arg1[%c0_2, %c0_3, %c0_4] : memref<2x8x4xf32, #tpu.memory_space<vmem>>, vector<2x8x4xf32>
    %4 = vector.shape_cast %3 : vector<2x8x4xf32> to vector<16x4xf32>
    %5 = arith.truncf %4 : vector<16x4xf32> to vector<16x4xbf16>
    %c0_5 = arith.constant 0 : index
    %c0_6 = arith.constant 0 : index
    %6 = vector.load %arg2[%c0_5, %c0_6] : memref<12x64xbf16, #tpu.memory_space<vmem>>, vector<12x64xbf16>
    %cst = arith.constant dense<0.000000e+00> : vector<16x64xf32>
    %7 = tpu.matmul %2, %6, %cst {dimension_numbers = #tpu.dot_dimension_numbers<[1], [0], [0], [1], [0, 0, 1, 1], [], []>} : vector<16x12xbf16>, vector<12x64xbf16>, vector<16x64xf32> -> vector<16x64xf32>
    %c0_7 = arith.constant 0 : index
    %c0_8 = arith.constant 0 : index
    %8 = vector.load %arg3[%c0_7, %c0_8] : memref<4x64xbf16, #tpu.memory_space<vmem>>, vector<4x64xbf16>
    %cst_9 = arith.constant dense<0.000000e+00> : vector<16x64xf32>
    %9 = tpu.matmul %5, %8, %cst_9 {dimension_numbers = #tpu.dot_dimension_numbers<[1], [0], [0], [1], [0, 0, 1, 1], [], []>} : vector<16x4xbf16>, vector<4x64xbf16>, vector<16x64xf32> -> vector<16x64xf32>
    %10 = arith.addf %7, %9 : vector<16x64xf32>
    %c0_10 = arith.constant 0 : index
    %c0_11 = arith.constant 0 : index
    %11 = vector.load %arg4[%c0_10, %c0_11] : memref<1x64xf32, #tpu.memory_space<vmem>>, vector<1x64xf32>
    %12 = vector.broadcast %11 : vector<1x64xf32> to vector<16x64xf32>
    %13 = arith.addf %10, %12 : vector<16x64xf32>
    %cst_12 = arith.constant 0.000000e+00 : f32
    %14 = vector.broadcast %cst_12 : f32 to vector<16x64xf32>
    %15 = arith.maximumf %13, %14 : vector<16x64xf32>
    %16 = arith.truncf %15 : vector<16x64xf32> to vector<16x64xbf16>
    %c0_13 = arith.constant 0 : index
    %c0_14 = arith.constant 0 : index
    %17 = vector.load %arg5[%c0_13, %c0_14] : memref<64x256xbf16, #tpu.memory_space<vmem>>, vector<64x256xbf16>
    %cst_15 = arith.constant dense<0.000000e+00> : vector<16x256xf32>
    %18 = tpu.matmul %16, %17, %cst_15 {dimension_numbers = #tpu.dot_dimension_numbers<[1], [0], [0], [1], [0, 0, 1, 1], [], []>} : vector<16x64xbf16>, vector<64x256xbf16>, vector<16x256xf32> -> vector<16x256xf32>
    %c0_16 = arith.constant 0 : index
    %c0_17 = arith.constant 0 : index
    %19 = vector.load %arg7[%c0_16, %c0_17] : memref<1x256xf32, #tpu.memory_space<vmem>>, vector<1x256xf32>
    %20 = vector.broadcast %19 : vector<1x256xf32> to vector<16x256xf32>
    %21 = arith.addf %18, %20 : vector<16x256xf32>
    %c0_18 = arith.constant 0 : index
    %c0_19 = arith.constant 0 : index
    %22 = vector.load %arg6[%c0_18, %c0_19] : memref<64x256xbf16, #tpu.memory_space<vmem>>, vector<64x256xbf16>
    %23 = tpu.iota {dimensions = array<i32: 1>} : vector<2x128xi32>
    %c64_i32 = arith.constant 64 : i32
    %24 = vector.broadcast %c64_i32 : i32 to vector<2x128xi32>
    %25 = arith.cmpi slt, %23, %24 : vector<2x128xi32>
    %cst_20 = arith.constant 0.000000e+00 : f32
    %26 = vector.broadcast %cst_20 : f32 to vector<2x64xf32>
    %cst_21 = arith.constant 0.000000e+00 : f32
    %27 = vector.broadcast %cst_21 : f32 to vector<2x64xf32>
    %28 = vector.extract_strided_slice %21 {offsets = [0, 0], sizes = [1, 256], strides = [1, 1]} : vector<16x256xf32> to vector<1x256xf32>
    %29 = vector.extract_strided_slice %21 {offsets = [8, 0], sizes = [1, 256], strides = [1, 1]} : vector<16x256xf32> to vector<1x256xf32>
    %30 = tpu.concatenate %28, %29 in 0 : vector<1x256xf32>, vector<1x256xf32> -> vector<2x256xf32>
    %31 = arith.truncf %26 : vector<2x64xf32> to vector<2x64xbf16>
    %cst_22 = arith.constant dense<0.000000e+00> : vector<2x256xf32>
    %32 = tpu.matmul %31, %22, %cst_22 {dimension_numbers = #tpu.dot_dimension_numbers<[1], [0], [0], [1], [0, 0, 1, 1], [], []>} : vector<2x64xbf16>, vector<64x256xbf16>, vector<2x256xf32> -> vector<2x256xf32>
    %33 = arith.addf %30, %32 : vector<2x256xf32>
    %34 = vector.extract_strided_slice %33 {offsets = [0, 0], sizes = [2, 128], strides = [1, 1]} : vector<2x256xf32> to vector<2x128xf32>
    %35 = arith.negf %34 : vector<2x128xf32>
    %36 = math.exp %35 : vector<2x128xf32>
    %cst_23 = arith.constant 1.000000e+00 : f32
    %37 = vector.broadcast %cst_23 : f32 to vector<2x128xf32>
    %38 = arith.addf %37, %36 : vector<2x128xf32>
    %39 = arith.divf %37, %38 : vector<2x128xf32>
    %40 = vector.extract_strided_slice %33 {offsets = [0, 128], sizes = [2, 128], strides = [1, 1]} : vector<2x256xf32> to vector<2x128xf32>
    %cst_24 = arith.constant 5.000000e-01 : f32
    %41 = vector.broadcast %cst_24 : f32 to vector<2x128xf32>
    %42 = arith.mulf %41, %40 : vector<2x128xf32>
    %43 = arith.select %25, %40, %42 : vector<2x128xi1>, vector<2x128xf32>
    %44 = math.tanh %43 : vector<2x128xf32>
    %cst_25 = arith.constant 5.000000e-01 : f32
    %45 = vector.broadcast %cst_25 : f32 to vector<2x128xf32>
    %46 = arith.mulf %45, %44 : vector<2x128xf32>
    %cst_26 = arith.constant 5.000000e-01 : f32
    %47 = vector.broadcast %cst_26 : f32 to vector<2x128xf32>
    %48 = arith.addf %46, %47 : vector<2x128xf32>
    %49 = arith.select %25, %44, %48 : vector<2x128xi1>, vector<2x128xf32>
    %50 = vector.extract_strided_slice %39 {offsets = [0, 0], sizes = [2, 64], strides = [1, 1]} : vector<2x128xf32> to vector<2x64xf32>
    %51 = vector.extract_strided_slice %39 {offsets = [0, 64], sizes = [2, 64], strides = [1, 1]} : vector<2x128xf32> to vector<2x64xf32>
    %52 = vector.extract_strided_slice %49 {offsets = [0, 0], sizes = [2, 64], strides = [1, 1]} : vector<2x128xf32> to vector<2x64xf32>
    %53 = vector.extract_strided_slice %49 {offsets = [0, 64], sizes = [2, 64], strides = [1, 1]} : vector<2x128xf32> to vector<2x64xf32>
    %54 = arith.mulf %51, %27 : vector<2x64xf32>
    %55 = arith.mulf %50, %52 : vector<2x64xf32>
    %56 = arith.addf %54, %55 : vector<2x64xf32>
    %57 = math.tanh %56 : vector<2x64xf32>
    %58 = arith.mulf %53, %57 : vector<2x64xf32>
    %59 = vector.extract_strided_slice %21 {offsets = [1, 0], sizes = [1, 256], strides = [1, 1]} : vector<16x256xf32> to vector<1x256xf32>
    %60 = vector.extract_strided_slice %21 {offsets = [9, 0], sizes = [1, 256], strides = [1, 1]} : vector<16x256xf32> to vector<1x256xf32>
    %61 = tpu.concatenate %59, %60 in 0 : vector<1x256xf32>, vector<1x256xf32> -> vector<2x256xf32>
    %62 = arith.truncf %58 : vector<2x64xf32> to vector<2x64xbf16>
    %cst_27 = arith.constant dense<0.000000e+00> : vector<2x256xf32>
    %63 = tpu.matmul %62, %22, %cst_27 {dimension_numbers = #tpu.dot_dimension_numbers<[1], [0], [0], [1], [0, 0, 1, 1], [], []>} : vector<2x64xbf16>, vector<64x256xbf16>, vector<2x256xf32> -> vector<2x256xf32>
    %64 = arith.addf %61, %63 : vector<2x256xf32>
    %65 = vector.extract_strided_slice %64 {offsets = [0, 0], sizes = [2, 128], strides = [1, 1]} : vector<2x256xf32> to vector<2x128xf32>
    %66 = arith.negf %65 : vector<2x128xf32>
    %67 = math.exp %66 : vector<2x128xf32>
    %cst_28 = arith.constant 1.000000e+00 : f32
    %68 = vector.broadcast %cst_28 : f32 to vector<2x128xf32>
    %69 = arith.addf %68, %67 : vector<2x128xf32>
    %70 = arith.divf %68, %69 : vector<2x128xf32>
    %71 = vector.extract_strided_slice %64 {offsets = [0, 128], sizes = [2, 128], strides = [1, 1]} : vector<2x256xf32> to vector<2x128xf32>
    %cst_29 = arith.constant 5.000000e-01 : f32
    %72 = vector.broadcast %cst_29 : f32 to vector<2x128xf32>
    %73 = arith.mulf %72, %71 : vector<2x128xf32>
    %74 = arith.select %25, %71, %73 : vector<2x128xi1>, vector<2x128xf32>
    %75 = math.tanh %74 : vector<2x128xf32>
    %cst_30 = arith.constant 5.000000e-01 : f32
    %76 = vector.broadcast %cst_30 : f32 to vector<2x128xf32>
    %77 = arith.mulf %76, %75 : vector<2x128xf32>
    %cst_31 = arith.constant 5.000000e-01 : f32
    %78 = vector.broadcast %cst_31 : f32 to vector<2x128xf32>
    %79 = arith.addf %77, %78 : vector<2x128xf32>
    %80 = arith.select %25, %75, %79 : vector<2x128xi1>, vector<2x128xf32>
    %81 = vector.extract_strided_slice %70 {offsets = [0, 0], sizes = [2, 64], strides = [1, 1]} : vector<2x128xf32> to vector<2x64xf32>
    %82 = vector.extract_strided_slice %70 {offsets = [0, 64], sizes = [2, 64], strides = [1, 1]} : vector<2x128xf32> to vector<2x64xf32>
    %83 = vector.extract_strided_slice %80 {offsets = [0, 0], sizes = [2, 64], strides = [1, 1]} : vector<2x128xf32> to vector<2x64xf32>
    %84 = vector.extract_strided_slice %80 {offsets = [0, 64], sizes = [2, 64], strides = [1, 1]} : vector<2x128xf32> to vector<2x64xf32>
    %85 = arith.mulf %82, %56 : vector<2x64xf32>
    %86 = arith.mulf %81, %83 : vector<2x64xf32>
    %87 = arith.addf %85, %86 : vector<2x64xf32>
    %88 = math.tanh %87 : vector<2x64xf32>
    %89 = arith.mulf %84, %88 : vector<2x64xf32>
    %90 = vector.extract_strided_slice %21 {offsets = [2, 0], sizes = [1, 256], strides = [1, 1]} : vector<16x256xf32> to vector<1x256xf32>
    %91 = vector.extract_strided_slice %21 {offsets = [10, 0], sizes = [1, 256], strides = [1, 1]} : vector<16x256xf32> to vector<1x256xf32>
    %92 = tpu.concatenate %90, %91 in 0 : vector<1x256xf32>, vector<1x256xf32> -> vector<2x256xf32>
    %93 = arith.truncf %89 : vector<2x64xf32> to vector<2x64xbf16>
    %cst_32 = arith.constant dense<0.000000e+00> : vector<2x256xf32>
    %94 = tpu.matmul %93, %22, %cst_32 {dimension_numbers = #tpu.dot_dimension_numbers<[1], [0], [0], [1], [0, 0, 1, 1], [], []>} : vector<2x64xbf16>, vector<64x256xbf16>, vector<2x256xf32> -> vector<2x256xf32>
    %95 = arith.addf %92, %94 : vector<2x256xf32>
    %96 = vector.extract_strided_slice %95 {offsets = [0, 0], sizes = [2, 128], strides = [1, 1]} : vector<2x256xf32> to vector<2x128xf32>
    %97 = arith.negf %96 : vector<2x128xf32>
    %98 = math.exp %97 : vector<2x128xf32>
    %cst_33 = arith.constant 1.000000e+00 : f32
    %99 = vector.broadcast %cst_33 : f32 to vector<2x128xf32>
    %100 = arith.addf %99, %98 : vector<2x128xf32>
    %101 = arith.divf %99, %100 : vector<2x128xf32>
    %102 = vector.extract_strided_slice %95 {offsets = [0, 128], sizes = [2, 128], strides = [1, 1]} : vector<2x256xf32> to vector<2x128xf32>
    %cst_34 = arith.constant 5.000000e-01 : f32
    %103 = vector.broadcast %cst_34 : f32 to vector<2x128xf32>
    %104 = arith.mulf %103, %102 : vector<2x128xf32>
    %105 = arith.select %25, %102, %104 : vector<2x128xi1>, vector<2x128xf32>
    %106 = math.tanh %105 : vector<2x128xf32>
    %cst_35 = arith.constant 5.000000e-01 : f32
    %107 = vector.broadcast %cst_35 : f32 to vector<2x128xf32>
    %108 = arith.mulf %107, %106 : vector<2x128xf32>
    %cst_36 = arith.constant 5.000000e-01 : f32
    %109 = vector.broadcast %cst_36 : f32 to vector<2x128xf32>
    %110 = arith.addf %108, %109 : vector<2x128xf32>
    %111 = arith.select %25, %106, %110 : vector<2x128xi1>, vector<2x128xf32>
    %112 = vector.extract_strided_slice %101 {offsets = [0, 0], sizes = [2, 64], strides = [1, 1]} : vector<2x128xf32> to vector<2x64xf32>
    %113 = vector.extract_strided_slice %101 {offsets = [0, 64], sizes = [2, 64], strides = [1, 1]} : vector<2x128xf32> to vector<2x64xf32>
    %114 = vector.extract_strided_slice %111 {offsets = [0, 0], sizes = [2, 64], strides = [1, 1]} : vector<2x128xf32> to vector<2x64xf32>
    %115 = vector.extract_strided_slice %111 {offsets = [0, 64], sizes = [2, 64], strides = [1, 1]} : vector<2x128xf32> to vector<2x64xf32>
    %116 = arith.mulf %113, %87 : vector<2x64xf32>
    %117 = arith.mulf %112, %114 : vector<2x64xf32>
    %118 = arith.addf %116, %117 : vector<2x64xf32>
    %119 = math.tanh %118 : vector<2x64xf32>
    %120 = arith.mulf %115, %119 : vector<2x64xf32>
    %121 = vector.extract_strided_slice %21 {offsets = [3, 0], sizes = [1, 256], strides = [1, 1]} : vector<16x256xf32> to vector<1x256xf32>
    %122 = vector.extract_strided_slice %21 {offsets = [11, 0], sizes = [1, 256], strides = [1, 1]} : vector<16x256xf32> to vector<1x256xf32>
    %123 = tpu.concatenate %121, %122 in 0 : vector<1x256xf32>, vector<1x256xf32> -> vector<2x256xf32>
    %124 = arith.truncf %120 : vector<2x64xf32> to vector<2x64xbf16>
    %cst_37 = arith.constant dense<0.000000e+00> : vector<2x256xf32>
    %125 = tpu.matmul %124, %22, %cst_37 {dimension_numbers = #tpu.dot_dimension_numbers<[1], [0], [0], [1], [0, 0, 1, 1], [], []>} : vector<2x64xbf16>, vector<64x256xbf16>, vector<2x256xf32> -> vector<2x256xf32>
    %126 = arith.addf %123, %125 : vector<2x256xf32>
    %127 = vector.extract_strided_slice %126 {offsets = [0, 0], sizes = [2, 128], strides = [1, 1]} : vector<2x256xf32> to vector<2x128xf32>
    %128 = arith.negf %127 : vector<2x128xf32>
    %129 = math.exp %128 : vector<2x128xf32>
    %cst_38 = arith.constant 1.000000e+00 : f32
    %130 = vector.broadcast %cst_38 : f32 to vector<2x128xf32>
    %131 = arith.addf %130, %129 : vector<2x128xf32>
    %132 = arith.divf %130, %131 : vector<2x128xf32>
    %133 = vector.extract_strided_slice %126 {offsets = [0, 128], sizes = [2, 128], strides = [1, 1]} : vector<2x256xf32> to vector<2x128xf32>
    %cst_39 = arith.constant 5.000000e-01 : f32
    %134 = vector.broadcast %cst_39 : f32 to vector<2x128xf32>
    %135 = arith.mulf %134, %133 : vector<2x128xf32>
    %136 = arith.select %25, %133, %135 : vector<2x128xi1>, vector<2x128xf32>
    %137 = math.tanh %136 : vector<2x128xf32>
    %cst_40 = arith.constant 5.000000e-01 : f32
    %138 = vector.broadcast %cst_40 : f32 to vector<2x128xf32>
    %139 = arith.mulf %138, %137 : vector<2x128xf32>
    %cst_41 = arith.constant 5.000000e-01 : f32
    %140 = vector.broadcast %cst_41 : f32 to vector<2x128xf32>
    %141 = arith.addf %139, %140 : vector<2x128xf32>
    %142 = arith.select %25, %137, %141 : vector<2x128xi1>, vector<2x128xf32>
    %143 = vector.extract_strided_slice %132 {offsets = [0, 0], sizes = [2, 64], strides = [1, 1]} : vector<2x128xf32> to vector<2x64xf32>
    %144 = vector.extract_strided_slice %132 {offsets = [0, 64], sizes = [2, 64], strides = [1, 1]} : vector<2x128xf32> to vector<2x64xf32>
    %145 = vector.extract_strided_slice %142 {offsets = [0, 0], sizes = [2, 64], strides = [1, 1]} : vector<2x128xf32> to vector<2x64xf32>
    %146 = vector.extract_strided_slice %142 {offsets = [0, 64], sizes = [2, 64], strides = [1, 1]} : vector<2x128xf32> to vector<2x64xf32>
    %147 = arith.mulf %144, %118 : vector<2x64xf32>
    %148 = arith.mulf %143, %145 : vector<2x64xf32>
    %149 = arith.addf %147, %148 : vector<2x64xf32>
    %150 = math.tanh %149 : vector<2x64xf32>
    %151 = arith.mulf %146, %150 : vector<2x64xf32>
    %152 = vector.extract_strided_slice %21 {offsets = [4, 0], sizes = [1, 256], strides = [1, 1]} : vector<16x256xf32> to vector<1x256xf32>
    %153 = vector.extract_strided_slice %21 {offsets = [12, 0], sizes = [1, 256], strides = [1, 1]} : vector<16x256xf32> to vector<1x256xf32>
    %154 = tpu.concatenate %152, %153 in 0 : vector<1x256xf32>, vector<1x256xf32> -> vector<2x256xf32>
    %155 = arith.truncf %151 : vector<2x64xf32> to vector<2x64xbf16>
    %cst_42 = arith.constant dense<0.000000e+00> : vector<2x256xf32>
    %156 = tpu.matmul %155, %22, %cst_42 {dimension_numbers = #tpu.dot_dimension_numbers<[1], [0], [0], [1], [0, 0, 1, 1], [], []>} : vector<2x64xbf16>, vector<64x256xbf16>, vector<2x256xf32> -> vector<2x256xf32>
    %157 = arith.addf %154, %156 : vector<2x256xf32>
    %158 = vector.extract_strided_slice %157 {offsets = [0, 0], sizes = [2, 128], strides = [1, 1]} : vector<2x256xf32> to vector<2x128xf32>
    %159 = arith.negf %158 : vector<2x128xf32>
    %160 = math.exp %159 : vector<2x128xf32>
    %cst_43 = arith.constant 1.000000e+00 : f32
    %161 = vector.broadcast %cst_43 : f32 to vector<2x128xf32>
    %162 = arith.addf %161, %160 : vector<2x128xf32>
    %163 = arith.divf %161, %162 : vector<2x128xf32>
    %164 = vector.extract_strided_slice %157 {offsets = [0, 128], sizes = [2, 128], strides = [1, 1]} : vector<2x256xf32> to vector<2x128xf32>
    %cst_44 = arith.constant 5.000000e-01 : f32
    %165 = vector.broadcast %cst_44 : f32 to vector<2x128xf32>
    %166 = arith.mulf %165, %164 : vector<2x128xf32>
    %167 = arith.select %25, %164, %166 : vector<2x128xi1>, vector<2x128xf32>
    %168 = math.tanh %167 : vector<2x128xf32>
    %cst_45 = arith.constant 5.000000e-01 : f32
    %169 = vector.broadcast %cst_45 : f32 to vector<2x128xf32>
    %170 = arith.mulf %169, %168 : vector<2x128xf32>
    %cst_46 = arith.constant 5.000000e-01 : f32
    %171 = vector.broadcast %cst_46 : f32 to vector<2x128xf32>
    %172 = arith.addf %170, %171 : vector<2x128xf32>
    %173 = arith.select %25, %168, %172 : vector<2x128xi1>, vector<2x128xf32>
    %174 = vector.extract_strided_slice %163 {offsets = [0, 0], sizes = [2, 64], strides = [1, 1]} : vector<2x128xf32> to vector<2x64xf32>
    %175 = vector.extract_strided_slice %163 {offsets = [0, 64], sizes = [2, 64], strides = [1, 1]} : vector<2x128xf32> to vector<2x64xf32>
    %176 = vector.extract_strided_slice %173 {offsets = [0, 0], sizes = [2, 64], strides = [1, 1]} : vector<2x128xf32> to vector<2x64xf32>
    %177 = vector.extract_strided_slice %173 {offsets = [0, 64], sizes = [2, 64], strides = [1, 1]} : vector<2x128xf32> to vector<2x64xf32>
    %178 = arith.mulf %175, %149 : vector<2x64xf32>
    %179 = arith.mulf %174, %176 : vector<2x64xf32>
    %180 = arith.addf %178, %179 : vector<2x64xf32>
    %181 = math.tanh %180 : vector<2x64xf32>
    %182 = arith.mulf %177, %181 : vector<2x64xf32>
    %183 = vector.extract_strided_slice %21 {offsets = [5, 0], sizes = [1, 256], strides = [1, 1]} : vector<16x256xf32> to vector<1x256xf32>
    %184 = vector.extract_strided_slice %21 {offsets = [13, 0], sizes = [1, 256], strides = [1, 1]} : vector<16x256xf32> to vector<1x256xf32>
    %185 = tpu.concatenate %183, %184 in 0 : vector<1x256xf32>, vector<1x256xf32> -> vector<2x256xf32>
    %186 = arith.truncf %182 : vector<2x64xf32> to vector<2x64xbf16>
    %cst_47 = arith.constant dense<0.000000e+00> : vector<2x256xf32>
    %187 = tpu.matmul %186, %22, %cst_47 {dimension_numbers = #tpu.dot_dimension_numbers<[1], [0], [0], [1], [0, 0, 1, 1], [], []>} : vector<2x64xbf16>, vector<64x256xbf16>, vector<2x256xf32> -> vector<2x256xf32>
    %188 = arith.addf %185, %187 : vector<2x256xf32>
    %189 = vector.extract_strided_slice %188 {offsets = [0, 0], sizes = [2, 128], strides = [1, 1]} : vector<2x256xf32> to vector<2x128xf32>
    %190 = arith.negf %189 : vector<2x128xf32>
    %191 = math.exp %190 : vector<2x128xf32>
    %cst_48 = arith.constant 1.000000e+00 : f32
    %192 = vector.broadcast %cst_48 : f32 to vector<2x128xf32>
    %193 = arith.addf %192, %191 : vector<2x128xf32>
    %194 = arith.divf %192, %193 : vector<2x128xf32>
    %195 = vector.extract_strided_slice %188 {offsets = [0, 128], sizes = [2, 128], strides = [1, 1]} : vector<2x256xf32> to vector<2x128xf32>
    %cst_49 = arith.constant 5.000000e-01 : f32
    %196 = vector.broadcast %cst_49 : f32 to vector<2x128xf32>
    %197 = arith.mulf %196, %195 : vector<2x128xf32>
    %198 = arith.select %25, %195, %197 : vector<2x128xi1>, vector<2x128xf32>
    %199 = math.tanh %198 : vector<2x128xf32>
    %cst_50 = arith.constant 5.000000e-01 : f32
    %200 = vector.broadcast %cst_50 : f32 to vector<2x128xf32>
    %201 = arith.mulf %200, %199 : vector<2x128xf32>
    %cst_51 = arith.constant 5.000000e-01 : f32
    %202 = vector.broadcast %cst_51 : f32 to vector<2x128xf32>
    %203 = arith.addf %201, %202 : vector<2x128xf32>
    %204 = arith.select %25, %199, %203 : vector<2x128xi1>, vector<2x128xf32>
    %205 = vector.extract_strided_slice %194 {offsets = [0, 0], sizes = [2, 64], strides = [1, 1]} : vector<2x128xf32> to vector<2x64xf32>
    %206 = vector.extract_strided_slice %194 {offsets = [0, 64], sizes = [2, 64], strides = [1, 1]} : vector<2x128xf32> to vector<2x64xf32>
    %207 = vector.extract_strided_slice %204 {offsets = [0, 0], sizes = [2, 64], strides = [1, 1]} : vector<2x128xf32> to vector<2x64xf32>
    %208 = vector.extract_strided_slice %204 {offsets = [0, 64], sizes = [2, 64], strides = [1, 1]} : vector<2x128xf32> to vector<2x64xf32>
    %209 = arith.mulf %206, %180 : vector<2x64xf32>
    %210 = arith.mulf %205, %207 : vector<2x64xf32>
    %211 = arith.addf %209, %210 : vector<2x64xf32>
    %212 = math.tanh %211 : vector<2x64xf32>
    %213 = arith.mulf %208, %212 : vector<2x64xf32>
    %214 = vector.extract_strided_slice %21 {offsets = [6, 0], sizes = [1, 256], strides = [1, 1]} : vector<16x256xf32> to vector<1x256xf32>
    %215 = vector.extract_strided_slice %21 {offsets = [14, 0], sizes = [1, 256], strides = [1, 1]} : vector<16x256xf32> to vector<1x256xf32>
    %216 = tpu.concatenate %214, %215 in 0 : vector<1x256xf32>, vector<1x256xf32> -> vector<2x256xf32>
    %217 = arith.truncf %213 : vector<2x64xf32> to vector<2x64xbf16>
    %cst_52 = arith.constant dense<0.000000e+00> : vector<2x256xf32>
    %218 = tpu.matmul %217, %22, %cst_52 {dimension_numbers = #tpu.dot_dimension_numbers<[1], [0], [0], [1], [0, 0, 1, 1], [], []>} : vector<2x64xbf16>, vector<64x256xbf16>, vector<2x256xf32> -> vector<2x256xf32>
    %219 = arith.addf %216, %218 : vector<2x256xf32>
    %220 = vector.extract_strided_slice %219 {offsets = [0, 0], sizes = [2, 128], strides = [1, 1]} : vector<2x256xf32> to vector<2x128xf32>
    %221 = arith.negf %220 : vector<2x128xf32>
    %222 = math.exp %221 : vector<2x128xf32>
    %cst_53 = arith.constant 1.000000e+00 : f32
    %223 = vector.broadcast %cst_53 : f32 to vector<2x128xf32>
    %224 = arith.addf %223, %222 : vector<2x128xf32>
    %225 = arith.divf %223, %224 : vector<2x128xf32>
    %226 = vector.extract_strided_slice %219 {offsets = [0, 128], sizes = [2, 128], strides = [1, 1]} : vector<2x256xf32> to vector<2x128xf32>
    %cst_54 = arith.constant 5.000000e-01 : f32
    %227 = vector.broadcast %cst_54 : f32 to vector<2x128xf32>
    %228 = arith.mulf %227, %226 : vector<2x128xf32>
    %229 = arith.select %25, %226, %228 : vector<2x128xi1>, vector<2x128xf32>
    %230 = math.tanh %229 : vector<2x128xf32>
    %cst_55 = arith.constant 5.000000e-01 : f32
    %231 = vector.broadcast %cst_55 : f32 to vector<2x128xf32>
    %232 = arith.mulf %231, %230 : vector<2x128xf32>
    %cst_56 = arith.constant 5.000000e-01 : f32
    %233 = vector.broadcast %cst_56 : f32 to vector<2x128xf32>
    %234 = arith.addf %232, %233 : vector<2x128xf32>
    %235 = arith.select %25, %230, %234 : vector<2x128xi1>, vector<2x128xf32>
    %236 = vector.extract_strided_slice %225 {offsets = [0, 0], sizes = [2, 64], strides = [1, 1]} : vector<2x128xf32> to vector<2x64xf32>
    %237 = vector.extract_strided_slice %225 {offsets = [0, 64], sizes = [2, 64], strides = [1, 1]} : vector<2x128xf32> to vector<2x64xf32>
    %238 = vector.extract_strided_slice %235 {offsets = [0, 0], sizes = [2, 64], strides = [1, 1]} : vector<2x128xf32> to vector<2x64xf32>
    %239 = vector.extract_strided_slice %235 {offsets = [0, 64], sizes = [2, 64], strides = [1, 1]} : vector<2x128xf32> to vector<2x64xf32>
    %240 = arith.mulf %237, %211 : vector<2x64xf32>
    %241 = arith.mulf %236, %238 : vector<2x64xf32>
    %242 = arith.addf %240, %241 : vector<2x64xf32>
    %243 = math.tanh %242 : vector<2x64xf32>
    %244 = arith.mulf %239, %243 : vector<2x64xf32>
    %245 = vector.extract_strided_slice %21 {offsets = [7, 0], sizes = [1, 256], strides = [1, 1]} : vector<16x256xf32> to vector<1x256xf32>
    %246 = vector.extract_strided_slice %21 {offsets = [15, 0], sizes = [1, 256], strides = [1, 1]} : vector<16x256xf32> to vector<1x256xf32>
    %247 = tpu.concatenate %245, %246 in 0 : vector<1x256xf32>, vector<1x256xf32> -> vector<2x256xf32>
    %248 = arith.truncf %244 : vector<2x64xf32> to vector<2x64xbf16>
    %cst_57 = arith.constant dense<0.000000e+00> : vector<2x256xf32>
    %249 = tpu.matmul %248, %22, %cst_57 {dimension_numbers = #tpu.dot_dimension_numbers<[1], [0], [0], [1], [0, 0, 1, 1], [], []>} : vector<2x64xbf16>, vector<64x256xbf16>, vector<2x256xf32> -> vector<2x256xf32>
    %250 = arith.addf %247, %249 : vector<2x256xf32>
    %251 = vector.extract_strided_slice %250 {offsets = [0, 0], sizes = [2, 128], strides = [1, 1]} : vector<2x256xf32> to vector<2x128xf32>
    %252 = arith.negf %251 : vector<2x128xf32>
    %253 = math.exp %252 : vector<2x128xf32>
    %cst_58 = arith.constant 1.000000e+00 : f32
    %254 = vector.broadcast %cst_58 : f32 to vector<2x128xf32>
    %255 = arith.addf %254, %253 : vector<2x128xf32>
    %256 = arith.divf %254, %255 : vector<2x128xf32>
    %257 = vector.extract_strided_slice %250 {offsets = [0, 128], sizes = [2, 128], strides = [1, 1]} : vector<2x256xf32> to vector<2x128xf32>
    %cst_59 = arith.constant 5.000000e-01 : f32
    %258 = vector.broadcast %cst_59 : f32 to vector<2x128xf32>
    %259 = arith.mulf %258, %257 : vector<2x128xf32>
    %260 = arith.select %25, %257, %259 : vector<2x128xi1>, vector<2x128xf32>
    %261 = math.tanh %260 : vector<2x128xf32>
    %cst_60 = arith.constant 5.000000e-01 : f32
    %262 = vector.broadcast %cst_60 : f32 to vector<2x128xf32>
    %263 = arith.mulf %262, %261 : vector<2x128xf32>
    %cst_61 = arith.constant 5.000000e-01 : f32
    %264 = vector.broadcast %cst_61 : f32 to vector<2x128xf32>
    %265 = arith.addf %263, %264 : vector<2x128xf32>
    %266 = arith.select %25, %261, %265 : vector<2x128xi1>, vector<2x128xf32>
    %267 = vector.extract_strided_slice %256 {offsets = [0, 0], sizes = [2, 64], strides = [1, 1]} : vector<2x128xf32> to vector<2x64xf32>
    %268 = vector.extract_strided_slice %256 {offsets = [0, 64], sizes = [2, 64], strides = [1, 1]} : vector<2x128xf32> to vector<2x64xf32>
    %269 = vector.extract_strided_slice %266 {offsets = [0, 0], sizes = [2, 64], strides = [1, 1]} : vector<2x128xf32> to vector<2x64xf32>
    %270 = vector.extract_strided_slice %266 {offsets = [0, 64], sizes = [2, 64], strides = [1, 1]} : vector<2x128xf32> to vector<2x64xf32>
    %271 = arith.mulf %268, %242 : vector<2x64xf32>
    %272 = arith.mulf %267, %269 : vector<2x64xf32>
    %273 = arith.addf %271, %272 : vector<2x64xf32>
    %274 = math.tanh %273 : vector<2x64xf32>
    %275 = arith.mulf %270, %274 : vector<2x64xf32>
    %cst_62 = arith.constant 0.000000e+00 : f32
    %276 = vector.broadcast %cst_62 : f32 to vector<2x64xf32>
    %277 = arith.maximumf %275, %276 : vector<2x64xf32>
    %278 = arith.truncf %277 : vector<2x64xf32> to vector<2x64xbf16>
    %c0_63 = arith.constant 0 : index
    %c0_64 = arith.constant 0 : index
    %279 = vector.load %arg8[%c0_63, %c0_64] : memref<64x4xbf16, #tpu.memory_space<vmem>>, vector<64x4xbf16>
    %cst_65 = arith.constant dense<0.000000e+00> : vector<2x4xf32>
    %280 = tpu.matmul %278, %279, %cst_65 {dimension_numbers = #tpu.dot_dimension_numbers<[1], [0], [0], [1], [0, 0, 1, 1], [], []>} : vector<2x64xbf16>, vector<64x4xbf16>, vector<2x4xf32> -> vector<2x4xf32>
    %c0_66 = arith.constant 0 : index
    %c0_67 = arith.constant 0 : index
    %281 = vector.load %arg9[%c0_66, %c0_67] : memref<1x4xf32, #tpu.memory_space<vmem>>, vector<1x4xf32>
    %282 = vector.broadcast %281 : vector<1x4xf32> to vector<2x4xf32>
    %283 = arith.addf %280, %282 : vector<2x4xf32>
    %c0_68 = arith.constant 0 : index
    %c0_69 = arith.constant 0 : index
    %284 = vector.load %arg10[%c0_68, %c0_69] : memref<2x4xf32, #tpu.memory_space<vmem>>, vector<2x4xf32>
    tpu.vector_store %arg10[%c0_68, %c0_69], %283 {strides = array<i32>} : memref<2x4xf32, #tpu.memory_space<vmem>>, vector<2x4xf32>,
    return
  }
}

</mosaic_0001>

<llo_original>
// kernel: critic_forward.1
$region0: #{critic_forward.1}
  #allocation0 [shape = 'u32[]', space=smem, size = 0x4, offset = 0x4, fixed_abs, tag = 'smem constant byte address 0x4 - core index']
  #allocation1 [shape = 'u32[144,128]{1,0:T(1,128)}', space=vmem, size = 0x12000, scoped, tag = 'internal scratch']
  %s0 = inlined_call_operand.hbm [shape: f32[2,8,12], index: 0, kind: input, shape index: {}]
  %s1 = inlined_call_operand.vmem [shape: f32[2,8,4], index: 1, kind: input, shape index: {}]
  %s2 = inlined_call_operand.vmem [shape: bf16[12,64], index: 2, kind: input, shape index: {}]
  %s3 = inlined_call_operand.vmem [shape: bf16[4,64], index: 3, kind: input, shape index: {}]
  %s4 = inlined_call_operand.hbm [shape: f32[1,64], index: 4, kind: input, shape index: {}]
  %s5 = inlined_call_operand.vmem [shape: bf16[64,256], index: 5, kind: input, shape index: {}]
  %s6 = inlined_call_operand.hbm [shape: bf16[64,256], index: 6, kind: input, shape index: {}]
  %s7 = inlined_call_operand.vmem [shape: f32[1,256], index: 7, kind: input, shape index: {}]
  %s8 = inlined_call_operand.vmem [shape: bf16[64,4], index: 8, kind: input, shape index: {}]
  %s9 = inlined_call_operand.vmem [shape: f32[1,4], index: 9, kind: input, shape index: {}]
  %s10 = inlined_call_operand.hbm [shape: f32[2,4], index: 10, kind: output, shape index: {}]
  %s11 = sld [smem:[#allocation0]]
  $region62: #{critic_forward.1} parent=0
    _
  %s13 = ssub.s32 1, %s11
  %s14 = scalar_select 0, %s13, %s11
  $region1: #{critic_forward.1} parent=0
    #allocation2 [shape = 'u8[8192]{0}', space=vmem, size = 0x2000, scoped, tag = 'input window, operand 0, single buffered']
    #allocation3 [shape = 's32[1]{0}', space=sflag, size = 0x4, scoped, tag = 'scoped memory for critic_forward.1']
    #allocation4 [shape = 's32[1]{0}', space=sflag, size = 0x4, scoped, tag = 'scoped memory for critic_forward.1']
    #allocation5 [shape = 'u8[512]{0}', space=vmem, size = 0x400, scoped, tag = 'input window, operand 4, single buffered']
    #allocation6 [shape = 's32[1]{0}', space=sflag, size = 0x4, scoped, tag = 'scoped memory for critic_forward.1']
    #allocation7 [shape = 'u8[32768]{0}', space=vmem, size = 0x8000, scoped, tag = 'input window, operand 6, single buffered']
    #allocation8 [shape = 'u8[1024]{0}', space=vmem, size = 0x400, scoped, tag = 'output window, operand 0, single buffered']
    %15 = vsyncpa [#allocation3], 0
    %16 = vsyncpa [#allocation6], 0
    %17 = vsyncpa [#allocation4], 0
    // Predicated region
    $region2: #{critic_forward.1} parent=1 // pred_check
      _
    $region3: #{critic_forward.1} parent=1 // pred_check_branch
      %19 = sbr.rel (0) target = $region5
    $region4: #{critic_forward.1} parent=1 // pred_region
      %s21 = ssub.s32 256, 256
      %22 = vsyncadd [#allocation3], %s21
      %s23 = sshll.u32 [#allocation2], 4
      %s24 = int_to_ptr.vmem [resolvable:$true] %s23
      %29 = dma.hbm_to_vmem [thread:$0]  %s0, 256, %s24, [#allocation3], 128, 128, 8
    $region5: #{critic_forward.1} parent=1 // pred_fallthru
      _
    // Predicated region
    $region6: #{critic_forward.1} parent=1 // pred_check
      _
    $region7: #{critic_forward.1} parent=1 // pred_check_branch
      %31 = sbr.rel (0) target = $region9
    $region8: #{critic_forward.1} parent=1 // pred_region
      _
    $region9: #{critic_forward.1} parent=1 // pred_fallthru
      _
    // Predicated region
    $region10: #{critic_forward.1} parent=1 // pred_check
      _
    $region11: #{critic_forward.1} parent=1 // pred_check_branch
      %33 = sbr.rel (0) target = $region13
    $region12: #{critic_forward.1} parent=1 // pred_region
      _
    $region13: #{critic_forward.1} parent=1 // pred_fallthru
      _
    // Predicated region
    $region14: #{critic_forward.1} parent=1 // pred_check
      _
    $region15: #{critic_forward.1} parent=1 // pred_check_branch
      %35 = sbr.rel (0) target = $region17
    $region16: #{critic_forward.1} parent=1 // pred_region
      _
    $region17: #{critic_forward.1} parent=1 // pred_fallthru
      _
    // Predicated region
    $region18: #{critic_forward.1} parent=1 // pred_check
      _
    $region19: #{critic_forward.1} parent=1 // pred_check_branch
      %37 = sbr.rel (0) target = $region21
    $region20: #{critic_forward.1} parent=1 // pred_region
      %s39 = ssub.s32 16, 16
      %40 = vsyncadd [#allocation6], %s39
      %s42 = sshll.u32 [#allocation5], 4
      %s43 = int_to_ptr.vmem [resolvable:$true] %s42
      %45 = dma.hbm_to_vmem [thread:$0]  %s4, 16, %s43, [#allocation6]
    $region21: #{critic_forward.1} parent=1 // pred_fallthru
      _
    // Predicated region
    $region22: #{critic_forward.1} parent=1 // pred_check
      _
    $region23: #{critic_forward.1} parent=1 // pred_check_branch
      %47 = sbr.rel (0) target = $region25
    $region24: #{critic_forward.1} parent=1 // pred_region
      _
    $region25: #{critic_forward.1} parent=1 // pred_fallthru
      _
    // Predicated region
    $region26: #{critic_forward.1} parent=1 // pred_check
      _
    $region27: #{critic_forward.1} parent=1 // pred_check_branch
      %49 = sbr.rel (0) target = $region29
    $region28: #{critic_forward.1} parent=1 // pred_region
      %s51 = ssub.s32 1024, 1024
      %52 = vsyncadd [#allocation6], %s51
      %s53 = sshll.u32 [#allocation7], 4
      %s54 = int_to_ptr.vmem [resolvable:$true] %s53
      %59 = dma.hbm_to_vmem [thread:$0]  %s6, 1024, %s54, [#allocation6], 128, 128, 8
    $region29: #{critic_forward.1} parent=1 // pred_fallthru
      _
    // Predicated region
    $region30: #{critic_forward.1} parent=1 // pred_check
      _
    $region31: #{critic_forward.1} parent=1 // pred_check_branch
      %61 = sbr.rel (0) target = $region33
    $region32: #{critic_forward.1} parent=1 // pred_region
      _
    $region33: #{critic_forward.1} parent=1 // pred_fallthru
      _
    // Predicated region
    $region34: #{critic_forward.1} parent=1 // pred_check
      _
    $region35: #{critic_forward.1} parent=1 // pred_check_branch
      %63 = sbr.rel (0) target = $region37
    $region36: #{critic_forward.1} parent=1 // pred_region
      _
    $region37: #{critic_forward.1} parent=1 // pred_fallthru
      _
    // Predicated region
    $region38: #{critic_forward.1} parent=1 // pred_check
      _
    $region39: #{critic_forward.1} parent=1 // pred_check_branch
      %65 = sbr.rel (0) target = $region41
    $region40: #{critic_forward.1} parent=1 // pred_region
      _
    $region41: #{critic_forward.1} parent=1 // pred_fallthru
      _
    // Predicated region
    $region42: #{critic_forward.1} parent=1 // pred_check
      _
    $region43: #{critic_forward.1} parent=1 // pred_check_branch
      %67 = sbr.rel (0) target = $region45
    $region44: #{critic_forward.1} parent=1 // pred_region
      %68 = dma.done [#allocation3], 256
    $region45: #{critic_forward.1} parent=1 // pred_fallthru
      _
    // Predicated region
    $region46: #{critic_forward.1} parent=1 // pred_check
      _
    $region47: #{critic_forward.1} parent=1 // pred_check_branch
      %70 = sbr.rel (0) target = $region49
    $region48: #{critic_forward.1} parent=1 // pred_region
      %71 = dma.done [#allocation6], 16
    $region49: #{critic_forward.1} parent=1 // pred_fallthru
      _
    // Predicated region
    $region50: #{critic_forward.1} parent=1 // pred_check
      _
    $region51: #{critic_forward.1} parent=1 // pred_check_branch
      %73 = sbr.rel (0) target = $region53
    $region52: #{critic_forward.1} parent=1 // pred_region
      %74 = dma.done [#allocation6], 1024
    $region53: #{critic_forward.1} parent=1 // pred_fallthru
      _
    %v76 = vld [vmem:[#allocation2] sm:$0xff]
    %v77 = vld [vmem:[#allocation2 + $0x8] sm:$0xff]
    %v78 = vpack.c.bf16 %v77, %v76
    %v79 = vld [vmem:[%s1] sm:$0xff]
    %v80 = vld [vmem:[%s1 + $0x8] sm:$0xff]
    %v81 = vpack.c.bf16 %v80, %v79
    %v82 = vld [vmem:[%s2] sm:$0xf]
    %v83 = vld [vmem:[%s2 + $0x4] sm:$0x3]
    %v84 = vld [vmem:[%s3] sm:$0x3]
    %vm85 = vcmask 31744
    %v87 = vsel %vm85, %v81, 0
    %vm89 = vcmask 1041408
    %v91 = vsel %vm89, %v84, 0
    %93 = vmatprep.subr.bf16.mxu0 0
    %94 = vmatpush1.bf16.msra.mxu0 %v91
    %95 = vmatprep.subr.bf16.mxu0 0
    %96 = vmatpush1.bf16.msra.mxu0 0
    %97 = vmatprep.subr.bf16.mxu0 0
    %98 = vmatpush1.bf16.msra.mxu0 0
    %99 = vmatprep.subr.bf16.mxu0 0
    %100 = vmatpush1.bf16.msra.mxu0 0
    %101 = vmatprep.subr.bf16.mxu0 0
    %102 = vmatpush1.bf16.msra.mxu0 0
    %103 = vmatprep.subr.bf16.mxu0 0
    %104 = vmatpush1.bf16.msra.mxu0 0
    %105 = vmatprep.subr.bf16.mxu0 0
    %106 = vmatpush1.bf16.msra.mxu0 0
    %107 = vmatprep.subr.bf16.mxu0 0
    %108 = vmatpush1.bf16.msra.mxu0 0
    %109 = vmatprep.subr.bf16.mxu0 0
    %110 = vmatpush1.bf16.msra.mxu0 0
    %111 = vmatprep.subr.bf16.mxu0 0
    %112 = vmatpush1.bf16.msra.mxu0 0
    %113 = vmatprep.subr.bf16.mxu0 0
    %114 = vmatpush1.bf16.msra.mxu0 0
    %115 = vmatprep.subr.bf16.mxu0 0
    %116 = vmatpush1.bf16.msra.mxu0 0
    %117 = vmatprep.subr.bf16.mxu0 0
    %118 = vmatpush1.bf16.msra.mxu0 0
    %119 = vmatprep.subr.bf16.mxu0 0
    %120 = vmatpush1.bf16.msra.mxu0 0
    %121 = vmatprep.subr.bf16.mxu0 0
    %122 = vmatpush1.bf16.msra.mxu0 0
    %123 = vmatprep.subr.bf16.mxu0 0
    %124 = vmatpush1.bf16.msra.mxu0 0
    %125 = vmatprep.mubr.bf16.mxu0 0
    %126 = vmatmul.mubr.bf16.gmra.mrb[0].mxu0 %v87
    %v127 = vpop.f32.mrb[0].mxu0
    %v128 = vadd.f32 0.0, %v127
    %v129 = vpop.f32.mrb[0].mxu0
    %v130 = vpop.f32.mrb[0].mxu0
    %v131 = vadd.f32 0.0, %v130
    %v132 = vpop.f32.mrb[0].mxu0
    %133 = vdwg.mxu0
    %v136 = vunpack.c.l.b16 %v82
    %v137 = vunpack.c.l.b16 %v83
    %v138 = vpack.c.b16 %v137, %v136
    %vm139 = vcmask 97280
    %v141 = vsel %vm139, %v78, 0
    %vm143 = vcmask 1045504
    %v145 = vsel %vm143, %v138, 0
    %147 = vmatprep.subr.bf16.mxu0 0
    %148 = vmatpush1.bf16.msra.mxu0 %v145
    %149 = vmatprep.subr.bf16.mxu0 0
    %150 = vmatpush1.bf16.msra.mxu0 0
    %151 = vmatprep.subr.bf16.mxu0 0
    %152 = vmatpush1.bf16.msra.mxu0 0
    %153 = vmatprep.subr.bf16.mxu0 0
    %154 = vmatpush1.bf16.msra.mxu0 0
    %155 = vmatprep.subr.bf16.mxu0 0
    %156 = vmatpush1.bf16.msra.mxu0 0
    %157 = vmatprep.subr.bf16.mxu0 0
    %158 = vmatpush1.bf16.msra.mxu0 0
    %159 = vmatprep.subr.bf16.mxu0 0
    %160 = vmatpush1.bf16.msra.mxu0 0
    %161 = vmatprep.subr.bf16.mxu0 0
    %162 = vmatpush1.bf16.msra.mxu0 0
    %163 = vmatprep.subr.bf16.mxu0 0
    %164 = vmatpush1.bf16.msra.mxu0 0
    %165 = vmatprep.subr.bf16.mxu0 0
    %166 = vmatpush1.bf16.msra.mxu0 0
    %167 = vmatprep.subr.bf16.mxu0 0
    %168 = vmatpush1.bf16.msra.mxu0 0
    %169 = vmatprep.subr.bf16.mxu0 0
    %170 = vmatpush1.bf16.msra.mxu0 0
    %171 = vmatprep.subr.bf16.mxu0 0
    %172 = vmatpush1.bf16.msra.mxu0 0
    %173 = vmatprep.subr.bf16.mxu0 0
    %174 = vmatpush1.bf16.msra.mxu0 0
    %175 = vmatprep.subr.bf16.mxu0 0
    %176 = vmatpush1.bf16.msra.mxu0 0
    %177 = vmatprep.subr.bf16.mxu0 0
    %178 = vmatpush1.bf16.msra.mxu0 0
    %179 = vmatprep.mubr.bf16.mxu0 0
    %180 = vmatmul.mubr.bf16.gmra.mrb[0].mxu0 %v141
    %v181 = vpop.f32.mrb[0].mxu0
    %v182 = vadd.f32 %v128, %v181
    %v183 = vpop.f32.mrb[0].mxu0
    %v184 = vpop.f32.mrb[0].mxu0
    %v185 = vadd.f32 %v131, %v184
    %v186 = vpop.f32.mrb[0].mxu0
    %187 = vdwg.mxu0
    %v188 = vld [vmem:[#allocation5] sm:$0x1]
    %v190 = vlaneseq
    %v191 = vshrl.u32 %v190, 7
    %v192 = vsub.s32 0, %v191
    %v193 = vrot.slane %v188, %v192
    %v195 = vadd.f32 %v182, %v193
    %v196 = vadd.f32 %v185, %v193
    %v197 = vmax.f32 %v195, 0.0
    %v198 = vmax.f32 %v196, 0.0
    %v199 = vpack.c.bf16 %v198, %v197
    %v200 = vld [vmem:[%s5] sm:$0xff]
    %v201 = vld [vmem:[%s5 + $0x8] sm:$0xff]
    %v202 = vld [vmem:[%s5 + $0x10] sm:$0xff]
    %v203 = vld [vmem:[%s5 + $0x18] sm:$0xff]
    %v204 = vld [vmem:[%s5 + $0x20] sm:$0xff]
    %v205 = vld [vmem:[%s5 + $0x28] sm:$0xff]
    %v206 = vld [vmem:[%s5 + $0x30] sm:$0xff]
    %v207 = vld [vmem:[%s5 + $0x38] sm:$0xff]
    %v208 = vld [vmem:[%s7] sm:$0x3]
    %v210 = vlaneseq
    %v211 = vshrl.u32 %v210, 7
    %v212 = vsub.s32 0, %v211
    %v213 = vrot.slane %v208, %v212
    %v214 = vlaneseq
    %v215 = vshrl.u32 %v214, 7
    %v216 = vsub.s32 1, %v215
    %v217 = vrot.slane %v208, %v216
    %v228 = vunpack.c.l.b16 %v200
    %v229 = vunpack.c.h.b16 %v200
    %v230 = vunpack.c.l.b16 %v201
    %v231 = vunpack.c.h.b16 %v201
    %v232 = vunpack.c.l.b16 %v202
    %v233 = vunpack.c.h.b16 %v202
    %v234 = vunpack.c.l.b16 %v203
    %v235 = vunpack.c.h.b16 %v203
    %v236 = vunpack.c.l.b16 %v204
    %v237 = vunpack.c.h.b16 %v204
    %v238 = vunpack.c.l.b16 %v205
    %v239 = vunpack.c.h.b16 %v205
    %v240 = vunpack.c.l.b16 %v206
    %v241 = vunpack.c.h.b16 %v206
    %v242 = vunpack.c.l.b16 %v207
    %v243 = vunpack.c.h.b16 %v207
    %v244 = vpack.c.b16 %v230, %v228
    %v245 = vpack.c.b16 %v231, %v229
    %v246 = vpack.c.b16 %v234, %v232
    %v247 = vpack.c.b16 %v235, %v233
    %v248 = vpack.c.b16 %v238, %v236
    %v249 = vpack.c.b16 %v239, %v237
    %v250 = vpack.c.b16 %v242, %v240
    %v251 = vpack.c.b16 %v243, %v241
    %vm260 = vcmask 523264
    %v262 = vsel %vm260, %v199, 0
    %264 = vmatprep.subr.bf16.mxu0 %v245
    %265 = vmatpush1.bf16.msra.mxu0 %v244
    %266 = vmatprep.subr.bf16.mxu0 %v247
    %267 = vmatpush1.bf16.msra.mxu0 %v246
    %268 = vmatprep.subr.bf16.mxu0 %v249
    %269 = vmatpush1.bf16.msra.mxu0 %v248
    %270 = vmatprep.subr.bf16.mxu0 %v251
    %271 = vmatpush1.bf16.msra.mxu0 %v250
    %272 = vmatprep.subr.bf16.mxu0 0
    %273 = vmatpush1.bf16.msra.mxu0 0
    %274 = vmatprep.subr.bf16.mxu0 0
    %275 = vmatpush1.bf16.msra.mxu0 0
    %276 = vmatprep.subr.bf16.mxu0 0
    %277 = vmatpush1.bf16.msra.mxu0 0
    %278 = vmatprep.subr.bf16.mxu0 0
    %279 = vmatpush1.bf16.msra.mxu0 0
    %280 = vmatprep.subr.bf16.mxu0 0
    %281 = vmatpush1.bf16.msra.mxu0 0
    %282 = vmatprep.subr.bf16.mxu0 0
    %283 = vmatpush1.bf16.msra.mxu0 0
    %284 = vmatprep.subr.bf16.mxu0 0
    %285 = vmatpush1.bf16.msra.mxu0 0
    %286 = vmatprep.subr.bf16.mxu0 0
    %287 = vmatpush1.bf16.msra.mxu0 0
    %288 = vmatprep.subr.bf16.mxu0 0
    %289 = vmatpush1.bf16.msra.mxu0 0
    %290 = vmatprep.subr.bf16.mxu0 0
    %291 = vmatpush1.bf16.msra.mxu0 0
    %292 = vmatprep.subr.bf16.mxu0 0
    %293 = vmatpush1.bf16.msra.mxu0 0
    %294 = vmatprep.subr.bf16.mxu0 0
    %295 = vmatpush1.bf16.msra.mxu0 0
    %296 = vmatprep.mubr.bf16.mxu0 0
    %297 = vmatmul.mubr.bf16.gmra.mrb[0].mxu0 %v262
    %v298 = vpop.f32.mrb[0].mxu0
    %v299 = vadd.f32 %v213, %v298
    %v300 = vpop.f32.mrb[0].mxu0
    %v301 = vadd.f32 %v217, %v300
    %v302 = vpop.f32.mrb[0].mxu0
    %v303 = vadd.f32 %v213, %v302
    %v304 = vpop.f32.mrb[0].mxu0
    %v305 = vadd.f32 %v217, %v304
    %306 = vdwg.mxu0
    %v307 = vld [vmem:[#allocation7] sm:$0xff]
    %v308 = vld [vmem:[#allocation7 + $0x8] sm:$0xff]
    %v309 = vld [vmem:[#allocation7 + $0x10] sm:$0xff]
    %v310 = vld [vmem:[#allocation7 + $0x18] sm:$0xff]
    %v311 = vld [vmem:[#allocation7 + $0x20] sm:$0xff]
    %v312 = vld [vmem:[#allocation7 + $0x28] sm:$0xff]
    %v313 = vld [vmem:[#allocation7 + $0x30] sm:$0xff]
    %v314 = vld [vmem:[#allocation7 + $0x38] sm:$0xff]
    %v315 = vlaneseq
    %v316 = vand.u32 %v315, 127
    %vm317 = vcmp.lt.s32.totalorder %v316, 64
    %v320 = vrot.slane %v303, 7
    %v321 = vrot.slane %v305, 7
    %vm324 = vcmask 1040384
    %v325 = vsel %vm324, %v299, %v320
    %v326 = vsel %vm324, %v301, %v321
    %v335 = vunpack.c.l.b16 %v307
    %v336 = vunpack.c.h.b16 %v307
    %v337 = vunpack.c.l.b16 %v308
    %v338 = vunpack.c.h.b16 %v308
    %v339 = vunpack.c.l.b16 %v309
    %v340 = vunpack.c.h.b16 %v309
    %v341 = vunpack.c.l.b16 %v310
    %v342 = vunpack.c.h.b16 %v310
    %v343 = vunpack.c.l.b16 %v311
    %v344 = vunpack.c.h.b16 %v311
    %v345 = vunpack.c.l.b16 %v312
    %v346 = vunpack.c.h.b16 %v312
    %v347 = vunpack.c.l.b16 %v313
    %v348 = vunpack.c.h.b16 %v313
    %v349 = vunpack.c.l.b16 %v314
    %v350 = vunpack.c.h.b16 %v314
    %v351 = vpack.c.b16 %v337, %v335
    %v352 = vpack.c.b16 %v338, %v336
    %v353 = vpack.c.b16 %v341, %v339
    %v354 = vpack.c.b16 %v342, %v340
    %v355 = vpack.c.b16 %v345, %v343
    %v356 = vpack.c.b16 %v346, %v344
    %v357 = vpack.c.b16 %v349, %v347
    %v358 = vpack.c.b16 %v350, %v348
    %v368 = vsel %vm260, 0, 0
    %370 = vmatprep.subr.bf16.mxu0 %v352
    %371 = vmatpush1.bf16.msra.mxu0 %v351
    %372 = vmatprep.subr.bf16.mxu0 %v354
    %373 = vmatpush1.bf16.msra.mxu0 %v353
    %374 = vmatprep.subr.bf16.mxu0 %v356
    %375 = vmatpush1.bf16.msra.mxu0 %v355
    %376 = vmatprep.subr.bf16.mxu0 %v358
    %377 = vmatpush1.bf16.msra.mxu0 %v357
    %378 = vmatprep.subr.bf16.mxu0 0
    %379 = vmatpush1.bf16.msra.mxu0 0
    %380 = vmatprep.subr.bf16.mxu0 0
    %381 = vmatpush1.bf16.msra.mxu0 0
    %382 = vmatprep.subr.bf16.mxu0 0
    %383 = vmatpush1.bf16.msra.mxu0 0
    %384 = vmatprep.subr.bf16.mxu0 0
    %385 = vmatpush1.bf16.msra.mxu0 0
    %386 = vmatprep.subr.bf16.mxu0 0
    %387 = vmatpush1.bf16.msra.mxu0 0
    %388 = vmatprep.subr.bf16.mxu0 0
    %389 = vmatpush1.bf16.msra.mxu0 0
    %390 = vmatprep.subr.bf16.mxu0 0
    %391 = vmatpush1.bf16.msra.mxu0 0
    %392 = vmatprep.subr.bf16.mxu0 0
    %393 = vmatpush1.bf16.msra.mxu0 0
    %394 = vmatprep.subr.bf16.mxu0 0
    %395 = vmatpush1.bf16.msra.mxu0 0
    %396 = vmatprep.subr.bf16.mxu0 0
    %397 = vmatpush1.bf16.msra.mxu0 0
    %398 = vmatprep.subr.bf16.mxu0 0
    %399 = vmatpush1.bf16.msra.mxu0 0
    %400 = vmatprep.subr.bf16.mxu0 0
    %401 = vmatpush1.bf16.msra.mxu0 0
    %402 = vmatprep.mubr.bf16.mxu0 0
    %403 = vmatmul.mubr.bf16.gmra.mrb[0].mxu0 %v368
    %v404 = vpop.f32.mrb[0].mxu0
    %v405 = vadd.f32 0.0, %v404
    %v406 = vpop.f32.mrb[0].mxu0
    %v407 = vadd.f32 0.0, %v406
    %v408 = vpop.f32.mrb[0].mxu0
    %v409 = vpop.f32.mrb[0].mxu0
    %410 = vdwg.mxu0
    %v411 = vadd.f32 %v325, %v405
    %v412 = vadd.f32 %v326, %v407
    %v413 = vxor.u32 %v411, 2147483648
    %v414 = vmul.f32 %v413, 1.442695
    %v415 = vpow.pop %v414
    %v416 = vadd.f32 %v415, 1.0
    %v417 = vrcp.pop %v416
    %v418 = vmul.f32 1.0, %v417
    %v419 = vmul.f32 %v412, 0.5
    %v420 = vsel %vm317, %v412, %v419
    %v421 = vtanh.pop %v420
    %v422 = vmul.f32 %v421, 0.5
    %v423 = vadd.f32 %v422, 0.5
    %v424 = vsel %vm317, %v421, %v423
    %v425 = vmul.f32 %v418, 0.0
    %v426 = vmul.f32 %v418, %v424
    %428 = vrot.lane.b32.xlu0 %v426, 64
    %v429 = vpop.permute.xlu0 %428
    %v431 = vadd.f32 %v425, %v429
    %v432 = vtanh.pop %v431
    %v433 = vmul.f32 %v424, %v432
    %v436 = vrot.slane %v299, 1
    %v437 = vrot.slane %v301, 1
    %v440 = vsel %vm324, %v436, %v303
    %v441 = vsel %vm324, %v437, %v305
    %v442 = vpack.c.bf16 %v433, %v433
    %444 = vrot.lane.b32.xlu0 %v442, 64
    %v445 = vpop.permute.xlu0 %444
    %v447 = vsel %vm260, %v445, 0
    %449 = vmatprep.subr.bf16.mxu0 %v352
    %450 = vmatpush1.bf16.msra.mxu0 %v351
    %451 = vmatprep.subr.bf16.mxu0 %v354
    %452 = vmatpush1.bf16.msra.mxu0 %v353
    %453 = vmatprep.subr.bf16.mxu0 %v356
    %454 = vmatpush1.bf16.msra.mxu0 %v355
    %455 = vmatprep.subr.bf16.mxu0 %v358
    %456 = vmatpush1.bf16.msra.mxu0 %v357
    %457 = vmatprep.subr.bf16.mxu0 0
    %458 = vmatpush1.bf16.msra.mxu0 0
    %459 = vmatprep.subr.bf16.mxu0 0
    %460 = vmatpush1.bf16.msra.mxu0 0
    %461 = vmatprep.subr.bf16.mxu0 0
    %462 = vmatpush1.bf16.msra.mxu0 0
    %463 = vmatprep.subr.bf16.mxu0 0
    %464 = vmatpush1.bf16.msra.mxu0 0
    %465 = vmatprep.subr.bf16.mxu0 0
    %466 = vmatpush1.bf16.msra.mxu0 0
    %467 = vmatprep.subr.bf16.mxu0 0
    %468 = vmatpush1.bf16.msra.mxu0 0
    %469 = vmatprep.subr.bf16.mxu0 0
    %470 = vmatpush1.bf16.msra.mxu0 0
    %471 = vmatprep.subr.bf16.mxu0 0
    %472 = vmatpush1.bf16.msra.mxu0 0
    %473 = vmatprep.subr.bf16.mxu0 0
    %474 = vmatpush1.bf16.msra.mxu0 0
    %475 = vmatprep.subr.bf16.mxu0 0
    %476 = vmatpush1.bf16.msra.mxu0 0
    %477 = vmatprep.subr.bf16.mxu0 0
    %478 = vmatpush1.bf16.msra.mxu0 0
    %479 = vmatprep.subr.bf16.mxu0 0
    %480 = vmatpush1.bf16.msra.mxu0 0
    %481 = vmatprep.mubr.bf16.mxu0 0
    %482 = vmatmul.mubr.bf16.gmra.mrb[0].mxu0 %v447
    %v483 = vpop.f32.mrb[0].mxu0
    %v484 = vadd.f32 0.0, %v483
    %v485 = vpop.f32.mrb[0].mxu0
    %v486 = vadd.f32 0.0, %v485
    %v487 = vpop.f32.mrb[0].mxu0
    %v488 = vpop.f32.mrb[0].mxu0
    %489 = vdwg.mxu0
    %v490 = vadd.f32 %v440, %v484
    %v491 = vadd.f32 %v441, %v486
    %v492 = vxor.u32 %v490, 2147483648
    %v493 = vmul.f32 %v492, 1.442695
    %v494 = vpow.pop %v493
    %v495 = vadd.f32 %v494, 1.0
    %v496 = vrcp.pop %v495
    %v497 = vmul.f32 1.0, %v496
    %v498 = vmul.f32 %v491, 0.5
    %v499 = vsel %vm317, %v491, %v498
    %v500 = vtanh.pop %v499
    %v501 = vmul.f32 %v500, 0.5
    %v502 = vadd.f32 %v501, 0.5
    %v503 = vsel %vm317, %v500, %v502
    %v504 = vmul.f32 %v497, %v431
    %v505 = vmul.f32 %v497, %v503
    %507 = vrot.lane.b32.xlu0 %v505, 64
    %v508 = vpop.permute.xlu0 %507
    %v510 = vadd.f32 %v504, %v508
    %v511 = vtanh.pop %v510
    %v512 = vmul.f32 %v503, %v511
    %v513 = vrot.slane %v299, 2
    %v514 = vrot.slane %v301, 2
    %v517 = vrot.slane %v303, 1
    %v518 = vrot.slane %v305, 1
    %v521 = vsel %vm324, %v513, %v517
    %v522 = vsel %vm324, %v514, %v518
    %v523 = vpack.c.bf16 %v512, %v512
    %525 = vrot.lane.b32.xlu0 %v523, 64
    %v526 = vpop.permute.xlu0 %525
    %v528 = vsel %vm260, %v526, 0
    %530 = vmatprep.subr.bf16.mxu0 %v352
    %531 = vmatpush1.bf16.msra.mxu0 %v351
    %532 = vmatprep.subr.bf16.mxu0 %v354
    %533 = vmatpush1.bf16.msra.mxu0 %v353
    %534 = vmatprep.subr.bf16.mxu0 %v356
    %535 = vmatpush1.bf16.msra.mxu0 %v355
    %536 = vmatprep.subr.bf16.mxu0 %v358
    %537 = vmatpush1.bf16.msra.mxu0 %v357
    %538 = vmatprep.subr.bf16.mxu0 0
    %539 = vmatpush1.bf16.msra.mxu0 0
    %540 = vmatprep.subr.bf16.mxu0 0
    %541 = vmatpush1.bf16.msra.mxu0 0
    %542 = vmatprep.subr.bf16.mxu0 0
    %543 = vmatpush1.bf16.msra.mxu0 0
    %544 = vmatprep.subr.bf16.mxu0 0
    %545 = vmatpush1.bf16.msra.mxu0 0
    %546 = vmatprep.subr.bf16.mxu0 0
    %547 = vmatpush1.bf16.msra.mxu0 0
    %548 = vmatprep.subr.bf16.mxu0 0
    %549 = vmatpush1.bf16.msra.mxu0 0
    %550 = vmatprep.subr.bf16.mxu0 0
    %551 = vmatpush1.bf16.msra.mxu0 0
    %552 = vmatprep.subr.bf16.mxu0 0
    %553 = vmatpush1.bf16.msra.mxu0 0
    %554 = vmatprep.subr.bf16.mxu0 0
    %555 = vmatpush1.bf16.msra.mxu0 0
    %556 = vmatprep.subr.bf16.mxu0 0
    %557 = vmatpush1.bf16.msra.mxu0 0
    %558 = vmatprep.subr.bf16.mxu0 0
    %559 = vmatpush1.bf16.msra.mxu0 0
    %560 = vmatprep.subr.bf16.mxu0 0
    %561 = vmatpush1.bf16.msra.mxu0 0
    %562 = vmatprep.mubr.bf16.mxu0 0
    %563 = vmatmul.mubr.bf16.gmra.mrb[0].mxu0 %v528
    %v564 = vpop.f32.mrb[0].mxu0
    %v565 = vadd.f32 0.0, %v564
    %v566 = vpop.f32.mrb[0].mxu0
    %v567 = vadd.f32 0.0, %v566
    %v568 = vpop.f32.mrb[0].mxu0
    %v569 = vpop.f32.mrb[0].mxu0
    %570 = vdwg.mxu0
    %v571 = vadd.f32 %v521, %v565
    %v572 = vadd.f32 %v522, %v567
    %v573 = vxor.u32 %v571, 2147483648
    %v574 = vmul.f32 %v573, 1.442695
    %v575 = vpow.pop %v574
    %v576 = vadd.f32 %v575, 1.0
    %v577 = vrcp.pop %v576
    %v578 = vmul.f32 1.0, %v577
    %v579 = vmul.f32 %v572, 0.5
    %v580 = vsel %vm317, %v572, %v579
    %v581 = vtanh.pop %v580
    %v582 = vmul.f32 %v581, 0.5
    %v583 = vadd.f32 %v582, 0.5
    %v584 = vsel %vm317, %v581, %v583
    %v585 = vmul.f32 %v578, %v510
    %v586 = vmul.f32 %v578, %v584
    %588 = vrot.lane.b32.xlu0 %v586, 64
    %v589 = vpop.permute.xlu0 %588
    %v591 = vadd.f32 %v585, %v589
    %v592 = vtanh.pop %v591
    %v593 = vmul.f32 %v584, %v592
    %v594 = vrot.slane %v299, 3
    %v595 = vrot.slane %v301, 3
    %v598 = vrot.slane %v303, 2
    %v599 = vrot.slane %v305, 2
    %v602 = vsel %vm324, %v594, %v598
    %v603 = vsel %vm324, %v595, %v599
    %v604 = vpack.c.bf16 %v593, %v593
    %606 = vrot.lane.b32.xlu0 %v604, 64
    %v607 = vpop.permute.xlu0 %606
    %v609 = vsel %vm260, %v607, 0
    %611 = vmatprep.subr.bf16.mxu0 %v352
    %612 = vmatpush1.bf16.msra.mxu0 %v351
    %613 = vmatprep.subr.bf16.mxu0 %v354
    %614 = vmatpush1.bf16.msra.mxu0 %v353
    %615 = vmatprep.subr.bf16.mxu0 %v356
    %616 = vmatpush1.bf16.msra.mxu0 %v355
    %617 = vmatprep.subr.bf16.mxu0 %v358
    %618 = vmatpush1.bf16.msra.mxu0 %v357
    %619 = vmatprep.subr.bf16.mxu0 0
    %620 = vmatpush1.bf16.msra.mxu0 0
    %621 = vmatprep.subr.bf16.mxu0 0
    %622 = vmatpush1.bf16.msra.mxu0 0
    %623 = vmatprep.subr.bf16.mxu0 0
    %624 = vmatpush1.bf16.msra.mxu0 0
    %625 = vmatprep.subr.bf16.mxu0 0
    %626 = vmatpush1.bf16.msra.mxu0 0
    %627 = vmatprep.subr.bf16.mxu0 0
    %628 = vmatpush1.bf16.msra.mxu0 0
    %629 = vmatprep.subr.bf16.mxu0 0
    %630 = vmatpush1.bf16.msra.mxu0 0
    %631 = vmatprep.subr.bf16.mxu0 0
    %632 = vmatpush1.bf16.msra.mxu0 0
    %633 = vmatprep.subr.bf16.mxu0 0
    %634 = vmatpush1.bf16.msra.mxu0 0
    %635 = vmatprep.subr.bf16.mxu0 0
    %636 = vmatpush1.bf16.msra.mxu0 0
    %637 = vmatprep.subr.bf16.mxu0 0
    %638 = vmatpush1.bf16.msra.mxu0 0
    %639 = vmatprep.subr.bf16.mxu0 0
    %640 = vmatpush1.bf16.msra.mxu0 0
    %641 = vmatprep.subr.bf16.mxu0 0
    %642 = vmatpush1.bf16.msra.mxu0 0
    %643 = vmatprep.mubr.bf16.mxu0 0
    %644 = vmatmul.mubr.bf16.gmra.mrb[0].mxu0 %v609
    %v645 = vpop.f32.mrb[0].mxu0
    %v646 = vadd.f32 0.0, %v645
    %v647 = vpop.f32.mrb[0].mxu0
    %v648 = vadd.f32 0.0, %v647
    %v649 = vpop.f32.mrb[0].mxu0
    %v650 = vpop.f32.mrb[0].mxu0
    %651 = vdwg.mxu0
    %v652 = vadd.f32 %v602, %v646
    %v653 = vadd.f32 %v603, %v648
    %v654 = vxor.u32 %v652, 2147483648
    %v655 = vmul.f32 %v654, 1.442695
    %v656 = vpow.pop %v655
    %v657 = vadd.f32 %v656, 1.0
    %v658 = vrcp.pop %v657
    %v659 = vmul.f32 1.0, %v658
    %v660 = vmul.f32 %v653, 0.5
    %v661 = vsel %vm317, %v653, %v660
    %v662 = vtanh.pop %v661
    %v663 = vmul.f32 %v662, 0.5
    %v664 = vadd.f32 %v663, 0.5
    %v665 = vsel %vm317, %v662, %v664
    %v666 = vmul.f32 %v659, %v591
    %v667 = vmul.f32 %v659, %v665
    %669 = vrot.lane.b32.xlu0 %v667, 64
    %v670 = vpop.permute.xlu0 %669
    %v672 = vadd.f32 %v666, %v670
    %v673 = vtanh.pop %v672
    %v674 = vmul.f32 %v665, %v673
    %v675 = vrot.slane %v299, 4
    %v676 = vrot.slane %v301, 4
    %v679 = vrot.slane %v303, 3
    %v680 = vrot.slane %v305, 3
    %v683 = vsel %vm324, %v675, %v679
    %v684 = vsel %vm324, %v676, %v680
    %v685 = vpack.c.bf16 %v674, %v674
    %687 = vrot.lane.b32.xlu0 %v685, 64
    %v688 = vpop.permute.xlu0 %687
    %v690 = vsel %vm260, %v688, 0
    %692 = vmatprep.subr.bf16.mxu0 %v352
    %693 = vmatpush1.bf16.msra.mxu0 %v351
    %694 = vmatprep.subr.bf16.mxu0 %v354
    %695 = vmatpush1.bf16.msra.mxu0 %v353
    %696 = vmatprep.subr.bf16.mxu0 %v356
    %697 = vmatpush1.bf16.msra.mxu0 %v355
    %698 = vmatprep.subr.bf16.mxu0 %v358
    %699 = vmatpush1.bf16.msra.mxu0 %v357
    %700 = vmatprep.subr.bf16.mxu0 0
    %701 = vmatpush1.bf16.msra.mxu0 0
    %702 = vmatprep.subr.bf16.mxu0 0
    %703 = vmatpush1.bf16.msra.mxu0 0
    %704 = vmatprep.subr.bf16.mxu0 0
    %705 = vmatpush1.bf16.msra.mxu0 0
    %706 = vmatprep.subr.bf16.mxu0 0
    %707 = vmatpush1.bf16.msra.mxu0 0
    %708 = vmatprep.subr.bf16.mxu0 0
    %709 = vmatpush1.bf16.msra.mxu0 0
    %710 = vmatprep.subr.bf16.mxu0 0
    %711 = vmatpush1.bf16.msra.mxu0 0
    %712 = vmatprep.subr.bf16.mxu0 0
    %713 = vmatpush1.bf16.msra.mxu0 0
    %714 = vmatprep.subr.bf16.mxu0 0
    %715 = vmatpush1.bf16.msra.mxu0 0
    %716 = vmatprep.subr.bf16.mxu0 0
    %717 = vmatpush1.bf16.msra.mxu0 0
    %718 = vmatprep.subr.bf16.mxu0 0
    %719 = vmatpush1.bf16.msra.mxu0 0
    %720 = vmatprep.subr.bf16.mxu0 0
    %721 = vmatpush1.bf16.msra.mxu0 0
    %722 = vmatprep.subr.bf16.mxu0 0
    %723 = vmatpush1.bf16.msra.mxu0 0
    %724 = vmatprep.mubr.bf16.mxu0 0
    %725 = vmatmul.mubr.bf16.gmra.mrb[0].mxu0 %v690
    %v726 = vpop.f32.mrb[0].mxu0
    %v727 = vadd.f32 0.0, %v726
    %v728 = vpop.f32.mrb[0].mxu0
    %v729 = vadd.f32 0.0, %v728
    %v730 = vpop.f32.mrb[0].mxu0
    %v731 = vpop.f32.mrb[0].mxu0
    %732 = vdwg.mxu0
    %v733 = vadd.f32 %v683, %v727
    %v734 = vadd.f32 %v684, %v729
    %v735 = vxor.u32 %v733, 2147483648
    %v736 = vmul.f32 %v735, 1.442695
    %v737 = vpow.pop %v736
    %v738 = vadd.f32 %v737, 1.0
    %v739 = vrcp.pop %v738
    %v740 = vmul.f32 1.0, %v739
    %v741 = vmul.f32 %v734, 0.5
    %v742 = vsel %vm317, %v734, %v741
    %v743 = vtanh.pop %v742
    %v744 = vmul.f32 %v743, 0.5
    %v745 = vadd.f32 %v744, 0.5
    %v746 = vsel %vm317, %v743, %v745
    %v747 = vmul.f32 %v740, %v672
    %v748 = vmul.f32 %v740, %v746
    %750 = vrot.lane.b32.xlu0 %v748, 64
    %v751 = vpop.permute.xlu0 %750
    %v753 = vadd.f32 %v747, %v751
    %v754 = vtanh.pop %v753
    %v755 = vmul.f32 %v746, %v754
    %v756 = vrot.slane %v299, 5
    %v757 = vrot.slane %v301, 5
    %v760 = vrot.slane %v303, 4
    %v761 = vrot.slane %v305, 4
    %v764 = vsel %vm324, %v756, %v760
    %v765 = vsel %vm324, %v757, %v761
    %v766 = vpack.c.bf16 %v755, %v755
    %768 = vrot.lane.b32.xlu0 %v766, 64
    %v769 = vpop.permute.xlu0 %768
    %v771 = vsel %vm260, %v769, 0
    %773 = vmatprep.subr.bf16.mxu0 %v352
    %774 = vmatpush1.bf16.msra.mxu0 %v351
    %775 = vmatprep.subr.bf16.mxu0 %v354
    %776 = vmatpush1.bf16.msra.mxu0 %v353
    %777 = vmatprep.subr.bf16.mxu0 %v356
    %778 = vmatpush1.bf16.msra.mxu0 %v355
    %779 = vmatprep.subr.bf16.mxu0 %v358
    %780 = vmatpush1.bf16.msra.mxu0 %v357
    %781 = vmatprep.subr.bf16.mxu0 0
    %782 = vmatpush1.bf16.msra.mxu0 0
    %783 = vmatprep.subr.bf16.mxu0 0
    %784 = vmatpush1.bf16.msra.mxu0 0
    %785 = vmatprep.subr.bf16.mxu0 0
    %786 = vmatpush1.bf16.msra.mxu0 0
    %787 = vmatprep.subr.bf16.mxu0 0
    %788 = vmatpush1.bf16.msra.mxu0 0
    %789 = vmatprep.subr.bf16.mxu0 0
    %790 = vmatpush1.bf16.msra.mxu0 0
    %791 = vmatprep.subr.bf16.mxu0 0
    %792 = vmatpush1.bf16.msra.mxu0 0
    %793 = vmatprep.subr.bf16.mxu0 0
    %794 = vmatpush1.bf16.msra.mxu0 0
    %795 = vmatprep.subr.bf16.mxu0 0
    %796 = vmatpush1.bf16.msra.mxu0 0
    %797 = vmatprep.subr.bf16.mxu0 0
    %798 = vmatpush1.bf16.msra.mxu0 0
    %799 = vmatprep.subr.bf16.mxu0 0
    %800 = vmatpush1.bf16.msra.mxu0 0
    %801 = vmatprep.subr.bf16.mxu0 0
    %802 = vmatpush1.bf16.msra.mxu0 0
    %803 = vmatprep.subr.bf16.mxu0 0
    %804 = vmatpush1.bf16.msra.mxu0 0
    %805 = vmatprep.mubr.bf16.mxu0 0
    %806 = vmatmul.mubr.bf16.gmra.mrb[0].mxu0 %v771
    %v807 = vpop.f32.mrb[0].mxu0
    %v808 = vadd.f32 0.0, %v807
    %v809 = vpop.f32.mrb[0].mxu0
    %v810 = vadd.f32 0.0, %v809
    %v811 = vpop.f32.mrb[0].mxu0
    %v812 = vpop.f32.mrb[0].mxu0
    %813 = vdwg.mxu0
    %v814 = vadd.f32 %v764, %v808
    %v815 = vadd.f32 %v765, %v810
    %v816 = vxor.u32 %v814, 2147483648
    %v817 = vmul.f32 %v816, 1.442695
    %v818 = vpow.pop %v817
    %v819 = vadd.f32 %v818, 1.0
    %v820 = vrcp.pop %v819
    %v821 = vmul.f32 1.0, %v820
    %v822 = vmul.f32 %v815, 0.5
    %v823 = vsel %vm317, %v815, %v822
    %v824 = vtanh.pop %v823
    %v825 = vmul.f32 %v824, 0.5
    %v826 = vadd.f32 %v825, 0.5
    %v827 = vsel %vm317, %v824, %v826
    %v828 = vmul.f32 %v821, %v753
    %v829 = vmul.f32 %v821, %v827
    %831 = vrot.lane.b32.xlu0 %v829, 64
    %v832 = vpop.permute.xlu0 %831
    %v834 = vadd.f32 %v828, %v832
    %v835 = vtanh.pop %v834
    %v836 = vmul.f32 %v827, %v835
    %v837 = vrot.slane %v299, 6
    %v838 = vrot.slane %v301, 6
    %v841 = vrot.slane %v303, 5
    %v842 = vrot.slane %v305, 5
    %v845 = vsel %vm324, %v837, %v841
    %v846 = vsel %vm324, %v838, %v842
    %v847 = vpack.c.bf16 %v836, %v836
    %849 = vrot.lane.b32.xlu0 %v847, 64
    %v850 = vpop.permute.xlu0 %849
    %v852 = vsel %vm260, %v850, 0
    %854 = vmatprep.subr.bf16.mxu0 %v352
    %855 = vmatpush1.bf16.msra.mxu0 %v351
    %856 = vmatprep.subr.bf16.mxu0 %v354
    %857 = vmatpush1.bf16.msra.mxu0 %v353
    %858 = vmatprep.subr.bf16.mxu0 %v356
    %859 = vmatpush1.bf16.msra.mxu0 %v355
    %860 = vmatprep.subr.bf16.mxu0 %v358
    %861 = vmatpush1.bf16.msra.mxu0 %v357
    %862 = vmatprep.subr.bf16.mxu0 0
    %863 = vmatpush1.bf16.msra.mxu0 0
    %864 = vmatprep.subr.bf16.mxu0 0
    %865 = vmatpush1.bf16.msra.mxu0 0
    %866 = vmatprep.subr.bf16.mxu0 0
    %867 = vmatpush1.bf16.msra.mxu0 0
    %868 = vmatprep.subr.bf16.mxu0 0
    %869 = vmatpush1.bf16.msra.mxu0 0
    %870 = vmatprep.subr.bf16.mxu0 0
    %871 = vmatpush1.bf16.msra.mxu0 0
    %872 = vmatprep.subr.bf16.mxu0 0
    %873 = vmatpush1.bf16.msra.mxu0 0
    %874 = vmatprep.subr.bf16.mxu0 0
    %875 = vmatpush1.bf16.msra.mxu0 0
    %876 = vmatprep.subr.bf16.mxu0 0
    %877 = vmatpush1.bf16.msra.mxu0 0
    %878 = vmatprep.subr.bf16.mxu0 0
    %879 = vmatpush1.bf16.msra.mxu0 0
    %880 = vmatprep.subr.bf16.mxu0 0
    %881 = vmatpush1.bf16.msra.mxu0 0
    %882 = vmatprep.subr.bf16.mxu0 0
    %883 = vmatpush1.bf16.msra.mxu0 0
    %884 = vmatprep.subr.bf16.mxu0 0
    %885 = vmatpush1.bf16.msra.mxu0 0
    %886 = vmatprep.mubr.bf16.mxu0 0
    %887 = vmatmul.mubr.bf16.gmra.mrb[0].mxu0 %v852
    %v888 = vpop.f32.mrb[0].mxu0
    %v889 = vadd.f32 0.0, %v888
    %v890 = vpop.f32.mrb[0].mxu0
    %v891 = vadd.f32 0.0, %v890
    %v892 = vpop.f32.mrb[0].mxu0
    %v893 = vpop.f32.mrb[0].mxu0
    %894 = vdwg.mxu0
    %v895 = vadd.f32 %v845, %v889
    %v896 = vadd.f32 %v846, %v891
    %v897 = vxor.u32 %v895, 2147483648
    %v898 = vmul.f32 %v897, 1.442695
    %v899 = vpow.pop %v898
    %v900 = vadd.f32 %v899, 1.0
    %v901 = vrcp.pop %v900
    %v902 = vmul.f32 1.0, %v901
    %v903 = vmul.f32 %v896, 0.5
    %v904 = vsel %vm317, %v896, %v903
    %v905 = vtanh.pop %v904
    %v906 = vmul.f32 %v905, 0.5
    %v907 = vadd.f32 %v906, 0.5
    %v908 = vsel %vm317, %v905, %v907
    %v909 = vmul.f32 %v902, %v834
    %v910 = vmul.f32 %v902, %v908
    %912 = vrot.lane.b32.xlu0 %v910, 64
    %v913 = vpop.permute.xlu0 %912
    %v915 = vadd.f32 %v909, %v913
    %v916 = vtanh.pop %v915
    %v917 = vmul.f32 %v908, %v916
    %v918 = vrot.slane %v299, 7
    %v919 = vrot.slane %v301, 7
    %v922 = vrot.slane %v303, 6
    %v923 = vrot.slane %v305, 6
    %v926 = vsel %vm324, %v918, %v922
    %v927 = vsel %vm324, %v919, %v923
    %v928 = vpack.c.bf16 %v917, %v917
    %930 = vrot.lane.b32.xlu0 %v928, 64
    %v931 = vpop.permute.xlu0 %930
    %v933 = vsel %vm260, %v931, 0
    %935 = vmatprep.subr.bf16.mxu0 %v352
    %936 = vmatpush1.bf16.msra.mxu0 %v351
    %937 = vmatprep.subr.bf16.mxu0 %v354
    %938 = vmatpush1.bf16.msra.mxu0 %v353
    %939 = vmatprep.subr.bf16.mxu0 %v356
    %940 = vmatpush1.bf16.msra.mxu0 %v355
    %941 = vmatprep.subr.bf16.mxu0 %v358
    %942 = vmatpush1.bf16.msra.mxu0 %v357
    %943 = vmatprep.subr.bf16.mxu0 0
    %944 = vmatpush1.bf16.msra.mxu0 0
    %945 = vmatprep.subr.bf16.mxu0 0
    %946 = vmatpush1.bf16.msra.mxu0 0
    %947 = vmatprep.subr.bf16.mxu0 0
    %948 = vmatpush1.bf16.msra.mxu0 0
    %949 = vmatprep.subr.bf16.mxu0 0
    %950 = vmatpush1.bf16.msra.mxu0 0
    %951 = vmatprep.subr.bf16.mxu0 0
    %952 = vmatpush1.bf16.msra.mxu0 0
    %953 = vmatprep.subr.bf16.mxu0 0
    %954 = vmatpush1.bf16.msra.mxu0 0
    %955 = vmatprep.subr.bf16.mxu0 0
    %956 = vmatpush1.bf16.msra.mxu0 0
    %957 = vmatprep.subr.bf16.mxu0 0
    %958 = vmatpush1.bf16.msra.mxu0 0
    %959 = vmatprep.subr.bf16.mxu0 0
    %960 = vmatpush1.bf16.msra.mxu0 0
    %961 = vmatprep.subr.bf16.mxu0 0
    %962 = vmatpush1.bf16.msra.mxu0 0
    %963 = vmatprep.subr.bf16.mxu0 0
    %964 = vmatpush1.bf16.msra.mxu0 0
    %965 = vmatprep.subr.bf16.mxu0 0
    %966 = vmatpush1.bf16.msra.mxu0 0
    %967 = vmatprep.mubr.bf16.mxu0 0
    %968 = vmatmul.mubr.bf16.gmra.mrb[0].mxu0 %v933
    %v969 = vpop.f32.mrb[0].mxu0
    %v970 = vadd.f32 0.0, %v969
    %v971 = vpop.f32.mrb[0].mxu0
    %v972 = vadd.f32 0.0, %v971
    %v973 = vpop.f32.mrb[0].mxu0
    %v974 = vpop.f32.mrb[0].mxu0
    %975 = vdwg.mxu0
    %v976 = vadd.f32 %v926, %v970
    %v977 = vadd.f32 %v927, %v972
    %v978 = vxor.u32 %v976, 2147483648
    %v979 = vmul.f32 %v978, 1.442695
    %v980 = vpow.pop %v979
    %v981 = vadd.f32 %v980, 1.0
    %v982 = vrcp.pop %v981
    %v983 = vmul.f32 1.0, %v982
    %v984 = vmul.f32 %v977, 0.5
    %v985 = vsel %vm317, %v977, %v984
    %v986 = vtanh.pop %v985
    %v987 = vmul.f32 %v986, 0.5
    %v988 = vadd.f32 %v987, 0.5
    %v989 = vsel %vm317, %v986, %v988
    %v990 = vmul.f32 %v983, %v915
    %v991 = vmul.f32 %v983, %v989
    %993 = vrot.lane.b32.xlu0 %v991, 64
    %v994 = vpop.permute.xlu0 %993
    %v996 = vadd.f32 %v990, %v994
    %v997 = vtanh.pop %v996
    %v998 = vmul.f32 %v989, %v997
    %v999 = vmax.f32 %v998, 0.0
    %v1000 = vpack.c.bf16 %v999, %v999
    %v1001 = vld [vmem:[%s8] sm:$0xf]
    %v1002 = vld [vmem:[%s8 + $0x4] sm:$0xf]
    %v1003 = vld [vmem:[%s8 + $0x8] sm:$0xf]
    %v1004 = vld [vmem:[%s8 + $0xc] sm:$0xf]
    %v1005 = vld [vmem:[%s8 + $0x10] sm:$0xf]
    %v1006 = vld [vmem:[%s8 + $0x14] sm:$0xf]
    %v1007 = vld [vmem:[%s8 + $0x18] sm:$0xf]
    %v1008 = vld [vmem:[%s8 + $0x1c] sm:$0xf]
    %v1009 = vld [vmem:[%s9] sm:$0x1]
    %v1011 = vlaneseq
    %v1012 = vshrl.u32 %v1011, 7
    %v1013 = vsub.s32 0, %v1012
    %v1014 = vrot.slane %v1009, %v1013
    %1017 = vrot.lane.b32.xlu0 %v1000, 64
    %v1018 = vpop.permute.xlu0 %1017
    %v1027 = vunpack.c.l.b16 %v1001
    %v1028 = vunpack.c.l.b16 %v1002
    %v1029 = vunpack.c.l.b16 %v1003
    %v1030 = vunpack.c.l.b16 %v1004
    %v1031 = vunpack.c.l.b16 %v1005
    %v1032 = vunpack.c.l.b16 %v1006
    %v1033 = vunpack.c.l.b16 %v1007
    %v1034 = vunpack.c.l.b16 %v1008
    %v1035 = vpack.c.b16 %v1028, %v1027
    %v1036 = vpack.c.b16 %v1030, %v1029
    %v1037 = vpack.c.b16 %v1032, %v1031
    %v1038 = vpack.c.b16 %v1034, %v1033
    %v1044 = vsel %vm260, %v1018, 0
    %1046 = vmatprep.subr.bf16.mxu0 0
    %1047 = vmatpush1.bf16.msra.mxu0 %v1035
    %1048 = vmatprep.subr.bf16.mxu0 0
    %1049 = vmatpush1.bf16.msra.mxu0 %v1036
    %1050 = vmatprep.subr.bf16.mxu0 0
    %1051 = vmatpush1.bf16.msra.mxu0 %v1037
    %1052 = vmatprep.subr.bf16.mxu0 0
    %1053 = vmatpush1.bf16.msra.mxu0 %v1038
    %1054 = vmatprep.subr.bf16.mxu0 0
    %1055 = vmatpush1.bf16.msra.mxu0 0
    %1056 = vmatprep.subr.bf16.mxu0 0
    %1057 = vmatpush1.bf16.msra.mxu0 0
    %1058 = vmatprep.subr.bf16.mxu0 0
    %1059 = vmatpush1.bf16.msra.mxu0 0
    %1060 = vmatprep.subr.bf16.mxu0 0
    %1061 = vmatpush1.bf16.msra.mxu0 0
    %1062 = vmatprep.subr.bf16.mxu0 0
    %1063 = vmatpush1.bf16.msra.mxu0 0
    %1064 = vmatprep.subr.bf16.mxu0 0
    %1065 = vmatpush1.bf16.msra.mxu0 0
    %1066 = vmatprep.subr.bf16.mxu0 0
    %1067 = vmatpush1.bf16.msra.mxu0 0
    %1068 = vmatprep.subr.bf16.mxu0 0
    %1069 = vmatpush1.bf16.msra.mxu0 0
    %1070 = vmatprep.subr.bf16.mxu0 0
    %1071 = vmatpush1.bf16.msra.mxu0 0
    %1072 = vmatprep.subr.bf16.mxu0 0
    %1073 = vmatpush1.bf16.msra.mxu0 0
    %1074 = vmatprep.subr.bf16.mxu0 0
    %1075 = vmatpush1.bf16.msra.mxu0 0
    %1076 = vmatprep.subr.bf16.mxu0 0
    %1077 = vmatpush1.bf16.msra.mxu0 0
    %1078 = vmatprep.mubr.bf16.mxu0 0
    %1079 = vmatmul.mubr.bf16.gmra.mrb[0].mxu0 %v1044
    %v1080 = vpop.f32.mrb[0].mxu0
    %v1081 = vadd.f32 %v1014, %v1080
    %v1082 = vpop.f32.mrb[0].mxu0
    %v1083 = vpop.f32.mrb[0].mxu0
    %v1084 = vpop.f32.mrb[0].mxu0
    %1085 = vdwg.mxu0
    %vm1086 = vcmask 25600
    %1087 = vst.msk [vmem:[#allocation8] sm:$0x3] %vm1086, %v1081
    // Predicated region
    $region54: #{critic_forward.1} parent=1 // pred_check
      _
    $region55: #{critic_forward.1} parent=1 // pred_check_branch
      %1089 = sbr.rel (0) target = $region57
    $region56: #{critic_forward.1} parent=1 // pred_region
      %s1091 = ssub.s32 32, 32
      %1092 = vsyncadd [#allocation4], %s1091
      %s1094 = sshll.u32 [#allocation8], 4
      %s1095 = int_to_ptr.vmem [resolvable:$true] %s1094
      %1097 = dma.vmem_to_hbm [thread:$0]  %s1095, 32, %s10, [#allocation4]
    $region57: #{critic_forward.1} parent=1 // pred_fallthru
      _
    // Predicated region
    $region58: #{critic_forward.1} parent=1 // pred_check
      _
    $region59: #{critic_forward.1} parent=1 // pred_check_branch
      %1099 = sbr.rel (0) target = $region61
    $region60: #{critic_forward.1} parent=1 // pred_region
      %1100 = dma.done [#allocation4], 32
    $region61: #{critic_forward.1} parent=1 // pred_fallthru
      _
    %1101 = vsyncpa [#allocation3], 1
    %1102 = vsyncpa [#allocation6], 1
    %1103 = vsyncpa [#allocation4], 1

</llo_original>
